<compile_context>
chip_gen: v7x
topology: tpu7x:2x2x1
jax: 0.10.0
libtpu: 0.0.40
codegen_flags: <defaults>
</compile_context>

<pallas_src>
import math
from functools import partial

import jax
import jax.numpy as jnp
import numpy as np
from jax import lax
from jax.experimental import pallas as pl
from jax.experimental.pallas import tpu as pltpu


# ----------------------------- Pallas kernels ------------------------------

def _bilstm_kernel(x_ref, wih_ref, b_ref, whh_f_ref, whh_b_ref,
                   out_ref, pf_ref, pb_ref, hf_ref, hb_ref, *, L, B, E):
    """Bidirectional single-layer LSTM.

    x_ref:   (N, E)   flattened sequence (N = L*B, row = t*B + b)
    wih_ref: (E, 8E)  [W_ih_fwd | W_ih_bwd], each with gate order i|f|g|o
    b_ref:   (1, 8E)  fused b_ih + b_hh for both directions
    whh_*:   (E, 4E)  recurrent weights per direction
    out_ref: (L, B, 2E)  fwd hidden in [:, :, :E], bwd hidden in [:, :, E:]
    """
    # (1) Hoisted input projection for BOTH directions: one big matmul.
    proj = jnp.dot(x_ref[...], wih_ref[...],
                   preferred_element_type=jnp.float32) + b_ref[...]
    pf_ref[...] = proj[:, 0:4 * E]
    pb_ref[...] = proj[:, 4 * E:8 * E]

    def cell(gates, c):
        i = jax.nn.sigmoid(gates[:, 0:E])
        f = jax.nn.sigmoid(gates[:, E:2 * E])
        g = jnp.tanh(gates[:, 2 * E:3 * E])
        o = jax.nn.sigmoid(gates[:, 3 * E:4 * E])
        c_new = f * c + i * g
        h_new = o * jnp.tanh(c_new)
        return h_new, c_new

    # (2) Recurrence: forward and reverse interleaved in one loop iteration.
    def step(t, carry):
        hf, cf, hb, cb = carry
        tr = L - 1 - t
        gf = pf_ref[pl.ds(t * B, B), :] + jnp.dot(
            hf, whh_f_ref[...], preferred_element_type=jnp.float32)
        gb = pb_ref[pl.ds(tr * B, B), :] + jnp.dot(
            hb, whh_b_ref[...], preferred_element_type=jnp.float32)
        hf_new, cf_new = cell(gf, cf)
        hb_new, cb_new = cell(gb, cb)
        hf_ref[t] = hf_new
        hb_ref[tr] = hb_new
        return (hf_new, cf_new, hb_new, cb_new)

    z = jnp.zeros((B, E), jnp.float32)
    lax.fori_loop(0, L, step, (z, z, z, z),
                  unroll=True if L <= 32 else 4)

    # (3) Write the head-ready concatenated layout once, in bulk.
    out_ref[:, :, 0:E] = hf_ref[...]
    out_ref[:, :, E:2 * E] = hb_ref[...]


def _head_kernel(h_ref, mask_ref, xc_ref, cf_ref,
                 w1_ref, b1_ref, g1_ref, be1_ref,
                 w2_ref, b2_ref, g2_ref, be2_ref,
                 w3_ref, b3_ref,
                 fam_ref, wfam_ref):
    """mask * lstm_out -> Linear/ReLU/LN -> Linear/ReLU/LN -> Linear,
    plus fam * (x_c @ clan_fam).  Rows are tiled by the grid (block = (TN, .))."""
    eps = 1e-5

    def layernorm(y, g, be):
        # single pass: var = E[y^2] - mu^2; rsqrt lands on the EUP slot
        mu = jnp.mean(y, axis=-1, keepdims=True)
        mu2 = jnp.mean(y * y, axis=-1, keepdims=True)
        var = mu2 - mu * mu
        return (y - mu) * lax.rsqrt(var + eps) * g + be

    x = h_ref[...] * mask_ref[...]                                   # (TN, 2E)

    y = jnp.dot(x, w1_ref[...], preferred_element_type=jnp.float32) + b1_ref[...]
    y = jnp.maximum(y, 0.0)
    y = layernorm(y, g1_ref[...], be1_ref[...])

    y = jnp.dot(y, w2_ref[...], preferred_element_type=jnp.float32) + b2_ref[...]
    y = jnp.maximum(y, 0.0)
    y = layernorm(y, g2_ref[...], be2_ref[...])

    fam = jnp.dot(y, w3_ref[...], preferred_element_type=jnp.float32) + b3_ref[...]
    weights = jnp.dot(xc_ref[...], cf_ref[...], preferred_element_type=jnp.float32)

    fam_ref[...] = fam
    wfam_ref[...] = fam * weights


# ------------------------------ JAX wrapper --------------------------------

_VMEM = pl.BlockSpec(memory_space=pltpu.MemorySpace.VMEM)  # full array in VMEM


def fam_lstm_batch(x, mask, x_c, params, *, row_block=512):
    """Forward pass of FamLSTMbatch. Returns (weighted_fam_vectors, fam)."""
    L, B, E = x.shape
    C, F = params["clan_fam"].shape
    N = L * B

    # fused weights for the hoisted input projection (256-wide RHS at E=32)
    x2 = x.reshape(N, E)
    wih = jnp.concatenate([params["wih_f"], params["wih_b"]], axis=1)   # (E, 8E)
    bias = jnp.concatenate([params["b_f"], params["b_b"]], axis=1)      # (1, 8E)

    lstm_cost = pl.CostEstimate(
        flops=2 * N * E * 8 * E + L * 2 * (2 * B * E * 4 * E),
        transcendentals=10 * N * E,
        bytes_accessed=4 * (N * E + E * 8 * E + 8 * E
                            + 2 * E * 4 * E + N * 2 * E),
    )

    h3 = pl.pallas_call(
        partial(_bilstm_kernel, L=L, B=B, E=E),
        out_shape=jax.ShapeDtypeStruct((L, B, 2 * E), jnp.float32),
        in_specs=[_VMEM] * 5,
        out_specs=_VMEM,
        scratch_shapes=[pltpu.VMEM((N, 4 * E), jnp.float32),   # fwd input proj
                        pltpu.VMEM((N, 4 * E), jnp.float32),   # bwd input proj
                        pltpu.VMEM((L, B, E), jnp.float32),    # fwd hidden seq
                        pltpu.VMEM((L, B, E), jnp.float32)],   # bwd hidden seq
        cost_estimate=lstm_cost,
    )(x2, wih, bias, params["whh_f"], params["whh_b"])

    # (L, B, 2E) -> (N, 2E): layout-preserving reshape (no concat round trip).
    h2 = h3.reshape(N, 2 * E)
    mask2 = mask.reshape(N, 1).astype(jnp.float32)
    xc2 = x_c.reshape(N, C)

    # row-tiled, pipelined head
    tn = row_block if N >= row_block else ((N + 7) // 8) * 8
    n_pad = pl.cdiv(N, tn) * tn
    if n_pad != N:
        pad = n_pad - N
        h2 = jnp.pad(h2, ((0, pad), (0, 0)))
        mask2 = jnp.pad(mask2, ((0, pad), (0, 0)))
        xc2 = jnp.pad(xc2, ((0, pad), (0, 0)))

    def row_spec(cols):
        return pl.BlockSpec((tn, cols), lambda i: (i, 0))

    def full_spec(arr):
        return pl.BlockSpec(arr.shape, lambda i: (0,) * arr.ndim)

    weights_list = [params["clan_fam"],
                    params["w1"], params["b1"], params["g1"], params["be1"],
                    params["w2"], params["b2"], params["g2"], params["be2"],
                    params["w3"], params["b3"]]

    head_cost = pl.CostEstimate(
        flops=2 * n_pad * (2 * E * 4 * E + 4 * E * 4 * E + 4 * E * F + C * F),
        transcendentals=2 * n_pad,
        bytes_accessed=4 * (n_pad * (2 * E + 1 + C + 2 * F)
                            + 2 * E * 4 * E + 4 * E * 4 * E + 4 * E * F + C * F),
    )

    fam, wfam = pl.pallas_call(
        _head_kernel,
        out_shape=(jax.ShapeDtypeStruct((n_pad, F), jnp.float32),
                   jax.ShapeDtypeStruct((n_pad, F), jnp.float32)),
        grid=(n_pad // tn,),
        in_specs=[row_spec(2 * E), row_spec(1), row_spec(C)]
                 + [full_spec(w) for w in weights_list],
        out_specs=(row_spec(F), row_spec(F)),
        compiler_params=pltpu.CompilerParams(
            dimension_semantics=("parallel",)),
        cost_estimate=head_cost,
    )(h2, mask2, xc2, *weights_list)

    fam = fam[:N].reshape(L, B, F)
    wfam = wfam[:N].reshape(L, B, F)
    return wfam, fam


# --------------------------- parameter creation -----------------------------

def init_params(key, E, C, F):
    ks = iter(jax.random.split(key, 24))

    def u(shape, bound):
        return jax.random.uniform(next(ks), shape, jnp.float32, -bound, bound)

    kE = 1.0 / math.sqrt(E)
    p = {}
    for d in ("f", "b"):                         # forward / reverse directions
        p[f"wih_{d}"] = u((E, 4 * E), kE)        # gates i|f|g|o along columns
        p[f"whh_{d}"] = u((E, 4 * E), kE)
        p[f"b_{d}"] = u((1, 4 * E), kE) + u((1, 4 * E), kE)   # b_ih + b_hh

    k1 = 1.0 / math.sqrt(2 * E)
    p["w1"] = u((2 * E, 4 * E), k1)
    p["b1"] = u((1, 4 * E), k1)
    p["g1"] = jnp.ones((1, 4 * E), jnp.float32)
    p["be1"] = jnp.zeros((1, 4 * E), jnp.float32)

    k2 = 1.0 / math.sqrt(4 * E)
    p["w2"] = u((4 * E, 4 * E), k2)
    p["b2"] = u((1, 4 * E), k2)
    p["g2"] = jnp.ones((1, 4 * E), jnp.float32)
    p["be2"] = jnp.zeros((1, 4 * E), jnp.float32)

    p["w3"] = u((4 * E, F), k2)
    p["b3"] = u((1, F), k2)

    # deterministic binary clan->family map (family f belongs to clan f % C)
    p["clan_fam"] = (jnp.arange(C)[:, None] ==
                     (jnp.arange(F)[None, :] % C)).astype(jnp.float32)
    return p


# ----------------------------- pure-JAX reference ---------------------------

def ref_forward(x, mask, x_c, p):
    L, B, E = x.shape

    def run_dir(wih, whh, b, reverse):
        xs = x[::-1] if reverse else x

        def step(carry, xt):
            h, c = carry
            g = xt @ wih + h @ whh + b                       # (B, 4E)
            i = jax.nn.sigmoid(g[:, :E])
            f = jax.nn.sigmoid(g[:, E:2 * E])
            gg = jnp.tanh(g[:, 2 * E:3 * E])
            o = jax.nn.sigmoid(g[:, 3 * E:4 * E])
            c = f * c + i * gg
            h = o * jnp.tanh(c)
            return (h, c), h

        h0 = jnp.zeros((B, E), jnp.float32)
        (_, _), hs = lax.scan(step, (h0, h0), xs)
        return hs[::-1] if reverse else hs

    hf = run_dir(p["wih_f"], p["whh_f"], p["b_f"], False)
    hb = run_dir(p["wih_b"], p["whh_b"], p["b_b"], True)
    h = jnp.concatenate([hf, hb], axis=-1) * mask[..., None]

    def ln(y, g, be):
        mu = y.mean(-1, keepdims=True)
        var = ((y - mu) ** 2).mean(-1, keepdims=True)
        return (y - mu) / jnp.sqrt(var + 1e-5) * g + be

    y = jnp.maximum(h @ p["w1"] + p["b1"], 0.0)
    y = ln(y, p["g1"], p["be1"])
    y = jnp.maximum(y @ p["w2"] + p["b2"], 0.0)
    y = ln(y, p["g2"], p["be2"])
    fam = y @ p["w3"] + p["b3"]
    weights = x_c @ p["clan_fam"]
    return fam * weights, fam


# ---------------------------------- main ------------------------------------

if __name__ == "__main__":
    L, B, E, C, F = 8, 2, 32, 8, 16
    key = jax.random.PRNGKey(0)
    kx, km, kc, kp = jax.random.split(key, 4)

    x = jax.random.normal(kx, (L, B, E), jnp.float32)
    mask = (jax.random.uniform(km, (L, B)) > 0.2).astype(jnp.float32)
    x_c = jax.nn.softmax(jax.random.normal(kc, (L, B, C)), axis=-1)
    params = init_params(kp, E, C, F)

    wfam, fam = fam_lstm_batch(x, mask, x_c, params)
    jax.block_until_ready((wfam, fam))

    wfam_r, fam_r = ref_forward(x, mask, x_c, params)
    np.testing.assert_allclose(np.asarray(fam), np.asarray(fam_r),
                               rtol=1e-3, atol=2e-3)
    np.testing.assert_allclose(np.asarray(wfam), np.asarray(wfam_r),
                               rtol=1e-3, atol=2e-3)

    print("KERNEL_OK")
</pallas_src>

<mosaic_0001>
module attributes {stable_mosaic.version = 11 : i64} {
  func.func @_bilstm_kernel(%arg0: memref<16x32xf32, #tpu.memory_space<vmem>>, %arg1: memref<32x256xf32, #tpu.memory_space<vmem>>, %arg2: memref<1x256xf32, #tpu.memory_space<vmem>>, %arg3: memref<32x128xf32, #tpu.memory_space<vmem>>, %arg4: memref<32x128xf32, #tpu.memory_space<vmem>>, %arg5: memref<8x2x64xf32, #tpu.memory_space<vmem>>, %arg6: memref<16x128xf32, #tpu.memory_space<vmem>>, %arg7: memref<16x128xf32, #tpu.memory_space<vmem>>, %arg8: memref<8x2x32xf32, #tpu.memory_space<vmem>>, %arg9: memref<8x2x32xf32, #tpu.memory_space<vmem>>) attributes {dimension_semantics = [], scalar_prefetch = 0 : i64, scratch_operands = 4 : i64, tpu.core_type = #tpu.core_type<tc>} {
    %c0 = arith.constant 0 : index
    %c0_0 = arith.constant 0 : index
    %0 = vector.load %arg0[%c0, %c0_0] : memref<16x32xf32, #tpu.memory_space<vmem>>, vector<16x32xf32>
    %c0_1 = arith.constant 0 : index
    %c0_2 = arith.constant 0 : index
    %1 = vector.load %arg1[%c0_1, %c0_2] : memref<32x256xf32, #tpu.memory_space<vmem>>, vector<32x256xf32>
    %cst = arith.constant dense<0.000000e+00> : vector<16x256xf32>
    %2 = tpu.matmul %0, %1, %cst {dimension_numbers = #tpu.dot_dimension_numbers<[1], [0], [0], [1], [0, 0, 1, 1], [], []>} : vector<16x32xf32>, vector<32x256xf32>, vector<16x256xf32> -> vector<16x256xf32>
    %c0_3 = arith.constant 0 : index
    %c0_4 = arith.constant 0 : index
    %3 = vector.load %arg2[%c0_3, %c0_4] : memref<1x256xf32, #tpu.memory_space<vmem>>, vector<1x256xf32>
    %4 = vector.broadcast %3 : vector<1x256xf32> to vector<16x256xf32>
    %5 = arith.addf %2, %4 : vector<16x256xf32>
    %6 = vector.extract_strided_slice %5 {offsets = [0, 0], sizes = [16, 128], strides = [1, 1]} : vector<16x256xf32> to vector<16x128xf32>
    %c0_5 = arith.constant 0 : index
    %c0_6 = arith.constant 0 : index
    %7 = vector.load %arg6[%c0_5, %c0_6] : memref<16x128xf32, #tpu.memory_space<vmem>>, vector<16x128xf32>
    tpu.vector_store %arg6[%c0_5, %c0_6], %6 {strides = array<i32>} : memref<16x128xf32, #tpu.memory_space<vmem>>, vector<16x128xf32>,
    %8 = vector.extract_strided_slice %5 {offsets = [0, 128], sizes = [16, 128], strides = [1, 1]} : vector<16x256xf32> to vector<16x128xf32>
    %c0_7 = arith.constant 0 : index
    %c0_8 = arith.constant 0 : index
    %9 = vector.load %arg7[%c0_7, %c0_8] : memref<16x128xf32, #tpu.memory_space<vmem>>, vector<16x128xf32>
    tpu.vector_store %arg7[%c0_7, %c0_8], %8 {strides = array<i32>} : memref<16x128xf32, #tpu.memory_space<vmem>>, vector<16x128xf32>,
    %cst_9 = arith.constant 0.000000e+00 : f32
    %10 = vector.broadcast %cst_9 : f32 to vector<2x32xf32>
    %c0_i32 = arith.constant 0 : i32
    %c7_i32 = arith.constant 7 : i32
    %11 = arith.subi %c7_i32, %c0_i32 : i32
    %c2_i32 = arith.constant 2 : i32
    %12 = arith.muli %c0_i32, %c2_i32 : i32
    %13 = arith.index_cast %12 : i32 to index
    %c0_10 = arith.constant 0 : index
    %14 = vector.load %arg6[%13, %c0_10] : memref<16x128xf32, #tpu.memory_space<vmem>>, vector<2x128xf32>
    %c0_11 = arith.constant 0 : index
    %c0_12 = arith.constant 0 : index
    %15 = vector.load %arg3[%c0_11, %c0_12] : memref<32x128xf32, #tpu.memory_space<vmem>>, vector<32x128xf32>
    %cst_13 = arith.constant dense<0.000000e+00> : vector<2x128xf32>
    %16 = tpu.matmul %10, %15, %cst_13 {dimension_numbers = #tpu.dot_dimension_numbers<[1], [0], [0], [1], [0, 0, 1, 1], [], []>} : vector<2x32xf32>, vector<32x128xf32>, vector<2x128xf32> -> vector<2x128xf32>
    %17 = arith.addf %14, %16 : vector<2x128xf32>
    %c2_i32_14 = arith.constant 2 : i32
    %18 = arith.muli %11, %c2_i32_14 : i32
    %19 = arith.index_cast %18 : i32 to index
    %c0_15 = arith.constant 0 : index
    %20 = vector.load %arg7[%19, %c0_15] : memref<16x128xf32, #tpu.memory_space<vmem>>, vector<2x128xf32>
    %c0_16 = arith.constant 0 : index
    %c0_17 = arith.constant 0 : index
    %21 = vector.load %arg4[%c0_16, %c0_17] : memref<32x128xf32, #tpu.memory_space<vmem>>, vector<32x128xf32>
    %cst_18 = arith.constant dense<0.000000e+00> : vector<2x128xf32>
    %22 = tpu.matmul %10, %21, %cst_18 {dimension_numbers = #tpu.dot_dimension_numbers<[1], [0], [0], [1], [0, 0, 1, 1], [], []>} : vector<2x32xf32>, vector<32x128xf32>, vector<2x128xf32> -> vector<2x128xf32>
    %23 = arith.addf %20, %22 : vector<2x128xf32>
    %24 = vector.extract_strided_slice %17 {offsets = [0, 0], sizes = [2, 32], strides = [1, 1]} : vector<2x128xf32> to vector<2x32xf32>
    %25 = arith.negf %24 : vector<2x32xf32>
    %26 = math.exp %25 : vector<2x32xf32>
    %cst_19 = arith.constant 1.000000e+00 : f32
    %27 = vector.broadcast %cst_19 : f32 to vector<2x32xf32>
    %28 = arith.addf %27, %26 : vector<2x32xf32>
    %29 = arith.divf %27, %28 : vector<2x32xf32>
    %30 = vector.extract_strided_slice %17 {offsets = [0, 32], sizes = [2, 32], strides = [1, 1]} : vector<2x128xf32> to vector<2x32xf32>
    %31 = arith.negf %30 : vector<2x32xf32>
    %32 = math.exp %31 : vector<2x32xf32>
    %cst_20 = arith.constant 1.000000e+00 : f32
    %33 = vector.broadcast %cst_20 : f32 to vector<2x32xf32>
    %34 = arith.addf %33, %32 : vector<2x32xf32>
    %35 = arith.divf %33, %34 : vector<2x32xf32>
    %36 = vector.extract_strided_slice %17 {offsets = [0, 64], sizes = [2, 32], strides = [1, 1]} : vector<2x128xf32> to vector<2x32xf32>
    %37 = math.tanh %36 : vector<2x32xf32>
    %38 = vector.extract_strided_slice %17 {offsets = [0, 96], sizes = [2, 32], strides = [1, 1]} : vector<2x128xf32> to vector<2x32xf32>
    %39 = arith.negf %38 : vector<2x32xf32>
    %40 = math.exp %39 : vector<2x32xf32>
    %cst_21 = arith.constant 1.000000e+00 : f32
    %41 = vector.broadcast %cst_21 : f32 to vector<2x32xf32>
    %42 = arith.addf %41, %40 : vector<2x32xf32>
    %43 = arith.divf %41, %42 : vector<2x32xf32>
    %44 = arith.mulf %35, %10 : vector<2x32xf32>
    %45 = arith.mulf %29, %37 : vector<2x32xf32>
    %46 = arith.addf %44, %45 : vector<2x32xf32>
    %47 = math.tanh %46 : vector<2x32xf32>
    %48 = arith.mulf %43, %47 : vector<2x32xf32>
    %49 = vector.extract_strided_slice %23 {offsets = [0, 0], sizes = [2, 32], strides = [1, 1]} : vector<2x128xf32> to vector<2x32xf32>
    %50 = arith.negf %49 : vector<2x32xf32>
    %51 = math.exp %50 : vector<2x32xf32>
    %cst_22 = arith.constant 1.000000e+00 : f32
    %52 = vector.broadcast %cst_22 : f32 to vector<2x32xf32>
    %53 = arith.addf %52, %51 : vector<2x32xf32>
    %54 = arith.divf %52, %53 : vector<2x32xf32>
    %55 = vector.extract_strided_slice %23 {offsets = [0, 32], sizes = [2, 32], strides = [1, 1]} : vector<2x128xf32> to vector<2x32xf32>
    %56 = arith.negf %55 : vector<2x32xf32>
    %57 = math.exp %56 : vector<2x32xf32>
    %cst_23 = arith.constant 1.000000e+00 : f32
    %58 = vector.broadcast %cst_23 : f32 to vector<2x32xf32>
    %59 = arith.addf %58, %57 : vector<2x32xf32>
    %60 = arith.divf %58, %59 : vector<2x32xf32>
    %61 = vector.extract_strided_slice %23 {offsets = [0, 64], sizes = [2, 32], strides = [1, 1]} : vector<2x128xf32> to vector<2x32xf32>
    %62 = math.tanh %61 : vector<2x32xf32>
    %63 = vector.extract_strided_slice %23 {offsets = [0, 96], sizes = [2, 32], strides = [1, 1]} : vector<2x128xf32> to vector<2x32xf32>
    %64 = arith.negf %63 : vector<2x32xf32>
    %65 = math.exp %64 : vector<2x32xf32>
    %cst_24 = arith.constant 1.000000e+00 : f32
    %66 = vector.broadcast %cst_24 : f32 to vector<2x32xf32>
    %67 = arith.addf %66, %65 : vector<2x32xf32>
    %68 = arith.divf %66, %67 : vector<2x32xf32>
    %69 = arith.mulf %60, %10 : vector<2x32xf32>
    %70 = arith.mulf %54, %62 : vector<2x32xf32>
    %71 = arith.addf %69, %70 : vector<2x32xf32>
    %72 = math.tanh %71 : vector<2x32xf32>
    %73 = arith.mulf %68, %72 : vector<2x32xf32>
    %74 = arith.index_cast %c0_i32 : i32 to index
    %c0_25 = arith.constant 0 : index
    %c0_26 = arith.constant 0 : index
    %75 = vector.load %arg8[%74, %c0_25, %c0_26] : memref<8x2x32xf32, #tpu.memory_space<vmem>>, vector<1x2x32xf32>
    %76 = vector.shape_cast %75 : vector<1x2x32xf32> to vector<2x32xf32>
    %77 = vector.shape_cast %48 : vector<2x32xf32> to vector<1x2x32xf32>
    tpu.vector_store %arg8[%74, %c0_25, %c0_26], %77 {strides = array<i32>} : memref<8x2x32xf32, #tpu.memory_space<vmem>>, vector<1x2x32xf32>,
    %78 = arith.index_cast %11 : i32 to index
    %c0_27 = arith.constant 0 : index
    %c0_28 = arith.constant 0 : index
    %79 = vector.load %arg9[%78, %c0_27, %c0_28] : memref<8x2x32xf32, #tpu.memory_space<vmem>>, vector<1x2x32xf32>
    %80 = vector.shape_cast %79 : vector<1x2x32xf32> to vector<2x32xf32>
    %81 = vector.shape_cast %73 : vector<2x32xf32> to vector<1x2x32xf32>
    tpu.vector_store %arg9[%78, %c0_27, %c0_28], %81 {strides = array<i32>} : memref<8x2x32xf32, #tpu.memory_space<vmem>>, vector<1x2x32xf32>,
    %c1_i32 = arith.constant 1 : i32
    %c7_i32_29 = arith.constant 7 : i32
    %82 = arith.subi %c7_i32_29, %c1_i32 : i32
    %c2_i32_30 = arith.constant 2 : i32
    %83 = arith.muli %c1_i32, %c2_i32_30 : i32
    %84 = arith.index_cast %83 : i32 to index
    %c0_31 = arith.constant 0 : index
    %85 = vector.load %arg6[%84, %c0_31] : memref<16x128xf32, #tpu.memory_space<vmem>>, vector<2x128xf32>
    %c0_32 = arith.constant 0 : index
    %c0_33 = arith.constant 0 : index
    %86 = vector.load %arg3[%c0_32, %c0_33] : memref<32x128xf32, #tpu.memory_space<vmem>>, vector<32x128xf32>
    %cst_34 = arith.constant dense<0.000000e+00> : vector<2x128xf32>
    %87 = tpu.matmul %48, %86, %cst_34 {dimension_numbers = #tpu.dot_dimension_numbers<[1], [0], [0], [1], [0, 0, 1, 1], [], []>} : vector<2x32xf32>, vector<32x128xf32>, vector<2x128xf32> -> vector<2x128xf32>
    %88 = arith.addf %85, %87 : vector<2x128xf32>
    %c2_i32_35 = arith.constant 2 : i32
    %89 = arith.muli %82, %c2_i32_35 : i32
    %90 = arith.index_cast %89 : i32 to index
    %c0_36 = arith.constant 0 : index
    %91 = vector.load %arg7[%90, %c0_36] : memref<16x128xf32, #tpu.memory_space<vmem>>, vector<2x128xf32>
    %c0_37 = arith.constant 0 : index
    %c0_38 = arith.constant 0 : index
    %92 = vector.load %arg4[%c0_37, %c0_38] : memref<32x128xf32, #tpu.memory_space<vmem>>, vector<32x128xf32>
    %cst_39 = arith.constant dense<0.000000e+00> : vector<2x128xf32>
    %93 = tpu.matmul %73, %92, %cst_39 {dimension_numbers = #tpu.dot_dimension_numbers<[1], [0], [0], [1], [0, 0, 1, 1], [], []>} : vector<2x32xf32>, vector<32x128xf32>, vector<2x128xf32> -> vector<2x128xf32>
    %94 = arith.addf %91, %93 : vector<2x128xf32>
    %95 = vector.extract_strided_slice %88 {offsets = [0, 0], sizes = [2, 32], strides = [1, 1]} : vector<2x128xf32> to vector<2x32xf32>
    %96 = arith.negf %95 : vector<2x32xf32>
    %97 = math.exp %96 : vector<2x32xf32>
    %cst_40 = arith.constant 1.000000e+00 : f32
    %98 = vector.broadcast %cst_40 : f32 to vector<2x32xf32>
    %99 = arith.addf %98, %97 : vector<2x32xf32>
    %100 = arith.divf %98, %99 : vector<2x32xf32>
    %101 = vector.extract_strided_slice %88 {offsets = [0, 32], sizes = [2, 32], strides = [1, 1]} : vector<2x128xf32> to vector<2x32xf32>
    %102 = arith.negf %101 : vector<2x32xf32>
    %103 = math.exp %102 : vector<2x32xf32>
    %cst_41 = arith.constant 1.000000e+00 : f32
    %104 = vector.broadcast %cst_41 : f32 to vector<2x32xf32>
    %105 = arith.addf %104, %103 : vector<2x32xf32>
    %106 = arith.divf %104, %105 : vector<2x32xf32>
    %107 = vector.extract_strided_slice %88 {offsets = [0, 64], sizes = [2, 32], strides = [1, 1]} : vector<2x128xf32> to vector<2x32xf32>
    %108 = math.tanh %107 : vector<2x32xf32>
    %109 = vector.extract_strided_slice %88 {offsets = [0, 96], sizes = [2, 32], strides = [1, 1]} : vector<2x128xf32> to vector<2x32xf32>
    %110 = arith.negf %109 : vector<2x32xf32>
    %111 = math.exp %110 : vector<2x32xf32>
    %cst_42 = arith.constant 1.000000e+00 : f32
    %112 = vector.broadcast %cst_42 : f32 to vector<2x32xf32>
    %113 = arith.addf %112, %111 : vector<2x32xf32>
    %114 = arith.divf %112, %113 : vector<2x32xf32>
    %115 = arith.mulf %106, %46 : vector<2x32xf32>
    %116 = arith.mulf %100, %108 : vector<2x32xf32>
    %117 = arith.addf %115, %116 : vector<2x32xf32>
    %118 = math.tanh %117 : vector<2x32xf32>
    %119 = arith.mulf %114, %118 : vector<2x32xf32>
    %120 = vector.extract_strided_slice %94 {offsets = [0, 0], sizes = [2, 32], strides = [1, 1]} : vector<2x128xf32> to vector<2x32xf32>
    %121 = arith.negf %120 : vector<2x32xf32>
    %122 = math.exp %121 : vector<2x32xf32>
    %cst_43 = arith.constant 1.000000e+00 : f32
    %123 = vector.broadcast %cst_43 : f32 to vector<2x32xf32>
    %124 = arith.addf %123, %122 : vector<2x32xf32>
    %125 = arith.divf %123, %124 : vector<2x32xf32>
    %126 = vector.extract_strided_slice %94 {offsets = [0, 32], sizes = [2, 32], strides = [1, 1]} : vector<2x128xf32> to vector<2x32xf32>
    %127 = arith.negf %126 : vector<2x32xf32>
    %128 = math.exp %127 : vector<2x32xf32>
    %cst_44 = arith.constant 1.000000e+00 : f32
    %129 = vector.broadcast %cst_44 : f32 to vector<2x32xf32>
    %130 = arith.addf %129, %128 : vector<2x32xf32>
    %131 = arith.divf %129, %130 : vector<2x32xf32>
    %132 = vector.extract_strided_slice %94 {offsets = [0, 64], sizes = [2, 32], strides = [1, 1]} : vector<2x128xf32> to vector<2x32xf32>
    %133 = math.tanh %132 : vector<2x32xf32>
    %134 = vector.extract_strided_slice %94 {offsets = [0, 96], sizes = [2, 32], strides = [1, 1]} : vector<2x128xf32> to vector<2x32xf32>
    %135 = arith.negf %134 : vector<2x32xf32>
    %136 = math.exp %135 : vector<2x32xf32>
    %cst_45 = arith.constant 1.000000e+00 : f32
    %137 = vector.broadcast %cst_45 : f32 to vector<2x32xf32>
    %138 = arith.addf %137, %136 : vector<2x32xf32>
    %139 = arith.divf %137, %138 : vector<2x32xf32>
    %140 = arith.mulf %131, %71 : vector<2x32xf32>
    %141 = arith.mulf %125, %133 : vector<2x32xf32>
    %142 = arith.addf %140, %141 : vector<2x32xf32>
    %143 = math.tanh %142 : vector<2x32xf32>
    %144 = arith.mulf %139, %143 : vector<2x32xf32>
    %145 = arith.index_cast %c1_i32 : i32 to index
    %c0_46 = arith.constant 0 : index
    %c0_47 = arith.constant 0 : index
    %146 = vector.load %arg8[%145, %c0_46, %c0_47] : memref<8x2x32xf32, #tpu.memory_space<vmem>>, vector<1x2x32xf32>
    %147 = vector.shape_cast %146 : vector<1x2x32xf32> to vector<2x32xf32>
    %148 = vector.shape_cast %119 : vector<2x32xf32> to vector<1x2x32xf32>
    tpu.vector_store %arg8[%145, %c0_46, %c0_47], %148 {strides = array<i32>} : memref<8x2x32xf32, #tpu.memory_space<vmem>>, vector<1x2x32xf32>,
    %149 = arith.index_cast %82 : i32 to index
    %c0_48 = arith.constant 0 : index
    %c0_49 = arith.constant 0 : index
    %150 = vector.load %arg9[%149, %c0_48, %c0_49] : memref<8x2x32xf32, #tpu.memory_space<vmem>>, vector<1x2x32xf32>
    %151 = vector.shape_cast %150 : vector<1x2x32xf32> to vector<2x32xf32>
    %152 = vector.shape_cast %144 : vector<2x32xf32> to vector<1x2x32xf32>
    tpu.vector_store %arg9[%149, %c0_48, %c0_49], %152 {strides = array<i32>} : memref<8x2x32xf32, #tpu.memory_space<vmem>>, vector<1x2x32xf32>,
    %c2_i32_50 = arith.constant 2 : i32
    %c7_i32_51 = arith.constant 7 : i32
    %153 = arith.subi %c7_i32_51, %c2_i32_50 : i32
    %c2_i32_52 = arith.constant 2 : i32
    %154 = arith.muli %c2_i32_50, %c2_i32_52 : i32
    %155 = arith.index_cast %154 : i32 to index
    %c0_53 = arith.constant 0 : index
    %156 = vector.load %arg6[%155, %c0_53] : memref<16x128xf32, #tpu.memory_space<vmem>>, vector<2x128xf32>
    %c0_54 = arith.constant 0 : index
    %c0_55 = arith.constant 0 : index
    %157 = vector.load %arg3[%c0_54, %c0_55] : memref<32x128xf32, #tpu.memory_space<vmem>>, vector<32x128xf32>
    %cst_56 = arith.constant dense<0.000000e+00> : vector<2x128xf32>
    %158 = tpu.matmul %119, %157, %cst_56 {dimension_numbers = #tpu.dot_dimension_numbers<[1], [0], [0], [1], [0, 0, 1, 1], [], []>} : vector<2x32xf32>, vector<32x128xf32>, vector<2x128xf32> -> vector<2x128xf32>
    %159 = arith.addf %156, %158 : vector<2x128xf32>
    %c2_i32_57 = arith.constant 2 : i32
    %160 = arith.muli %153, %c2_i32_57 : i32
    %161 = arith.index_cast %160 : i32 to index
    %c0_58 = arith.constant 0 : index
    %162 = vector.load %arg7[%161, %c0_58] : memref<16x128xf32, #tpu.memory_space<vmem>>, vector<2x128xf32>
    %c0_59 = arith.constant 0 : index
    %c0_60 = arith.constant 0 : index
    %163 = vector.load %arg4[%c0_59, %c0_60] : memref<32x128xf32, #tpu.memory_space<vmem>>, vector<32x128xf32>
    %cst_61 = arith.constant dense<0.000000e+00> : vector<2x128xf32>
    %164 = tpu.matmul %144, %163, %cst_61 {dimension_numbers = #tpu.dot_dimension_numbers<[1], [0], [0], [1], [0, 0, 1, 1], [], []>} : vector<2x32xf32>, vector<32x128xf32>, vector<2x128xf32> -> vector<2x128xf32>
    %165 = arith.addf %162, %164 : vector<2x128xf32>
    %166 = vector.extract_strided_slice %159 {offsets = [0, 0], sizes = [2, 32], strides = [1, 1]} : vector<2x128xf32> to vector<2x32xf32>
    %167 = arith.negf %166 : vector<2x32xf32>
    %168 = math.exp %167 : vector<2x32xf32>
    %cst_62 = arith.constant 1.000000e+00 : f32
    %169 = vector.broadcast %cst_62 : f32 to vector<2x32xf32>
    %170 = arith.addf %169, %168 : vector<2x32xf32>
    %171 = arith.divf %169, %170 : vector<2x32xf32>
    %172 = vector.extract_strided_slice %159 {offsets = [0, 32], sizes = [2, 32], strides = [1, 1]} : vector<2x128xf32> to vector<2x32xf32>
    %173 = arith.negf %172 : vector<2x32xf32>
    %174 = math.exp %173 : vector<2x32xf32>
    %cst_63 = arith.constant 1.000000e+00 : f32
    %175 = vector.broadcast %cst_63 : f32 to vector<2x32xf32>
    %176 = arith.addf %175, %174 : vector<2x32xf32>
    %177 = arith.divf %175, %176 : vector<2x32xf32>
    %178 = vector.extract_strided_slice %159 {offsets = [0, 64], sizes = [2, 32], strides = [1, 1]} : vector<2x128xf32> to vector<2x32xf32>
    %179 = math.tanh %178 : vector<2x32xf32>
    %180 = vector.extract_strided_slice %159 {offsets = [0, 96], sizes = [2, 32], strides = [1, 1]} : vector<2x128xf32> to vector<2x32xf32>
    %181 = arith.negf %180 : vector<2x32xf32>
    %182 = math.exp %181 : vector<2x32xf32>
    %cst_64 = arith.constant 1.000000e+00 : f32
    %183 = vector.broadcast %cst_64 : f32 to vector<2x32xf32>
    %184 = arith.addf %183, %182 : vector<2x32xf32>
    %185 = arith.divf %183, %184 : vector<2x32xf32>
    %186 = arith.mulf %177, %117 : vector<2x32xf32>
    %187 = arith.mulf %171, %179 : vector<2x32xf32>
    %188 = arith.addf %186, %187 : vector<2x32xf32>
    %189 = math.tanh %188 : vector<2x32xf32>
    %190 = arith.mulf %185, %189 : vector<2x32xf32>
    %191 = vector.extract_strided_slice %165 {offsets = [0, 0], sizes = [2, 32], strides = [1, 1]} : vector<2x128xf32> to vector<2x32xf32>
    %192 = arith.negf %191 : vector<2x32xf32>
    %193 = math.exp %192 : vector<2x32xf32>
    %cst_65 = arith.constant 1.000000e+00 : f32
    %194 = vector.broadcast %cst_65 : f32 to vector<2x32xf32>
    %195 = arith.addf %194, %193 : vector<2x32xf32>
    %196 = arith.divf %194, %195 : vector<2x32xf32>
    %197 = vector.extract_strided_slice %165 {offsets = [0, 32], sizes = [2, 32], strides = [1, 1]} : vector<2x128xf32> to vector<2x32xf32>
    %198 = arith.negf %197 : vector<2x32xf32>
    %199 = math.exp %198 : vector<2x32xf32>
    %cst_66 = arith.constant 1.000000e+00 : f32
    %200 = vector.broadcast %cst_66 : f32 to vector<2x32xf32>
    %201 = arith.addf %200, %199 : vector<2x32xf32>
    %202 = arith.divf %200, %201 : vector<2x32xf32>
    %203 = vector.extract_strided_slice %165 {offsets = [0, 64], sizes = [2, 32], strides = [1, 1]} : vector<2x128xf32> to vector<2x32xf32>
    %204 = math.tanh %203 : vector<2x32xf32>
    %205 = vector.extract_strided_slice %165 {offsets = [0, 96], sizes = [2, 32], strides = [1, 1]} : vector<2x128xf32> to vector<2x32xf32>
    %206 = arith.negf %205 : vector<2x32xf32>
    %207 = math.exp %206 : vector<2x32xf32>
    %cst_67 = arith.constant 1.000000e+00 : f32
    %208 = vector.broadcast %cst_67 : f32 to vector<2x32xf32>
    %209 = arith.addf %208, %207 : vector<2x32xf32>
    %210 = arith.divf %208, %209 : vector<2x32xf32>
    %211 = arith.mulf %202, %142 : vector<2x32xf32>
    %212 = arith.mulf %196, %204 : vector<2x32xf32>
    %213 = arith.addf %211, %212 : vector<2x32xf32>
    %214 = math.tanh %213 : vector<2x32xf32>
    %215 = arith.mulf %210, %214 : vector<2x32xf32>
    %216 = arith.index_cast %c2_i32_50 : i32 to index
    %c0_68 = arith.constant 0 : index
    %c0_69 = arith.constant 0 : index
    %217 = vector.load %arg8[%216, %c0_68, %c0_69] : memref<8x2x32xf32, #tpu.memory_space<vmem>>, vector<1x2x32xf32>
    %218 = vector.shape_cast %217 : vector<1x2x32xf32> to vector<2x32xf32>
    %219 = vector.shape_cast %190 : vector<2x32xf32> to vector<1x2x32xf32>
    tpu.vector_store %arg8[%216, %c0_68, %c0_69], %219 {strides = array<i32>} : memref<8x2x32xf32, #tpu.memory_space<vmem>>, vector<1x2x32xf32>,
    %220 = arith.index_cast %153 : i32 to index
    %c0_70 = arith.constant 0 : index
    %c0_71 = arith.constant 0 : index
    %221 = vector.load %arg9[%220, %c0_70, %c0_71] : memref<8x2x32xf32, #tpu.memory_space<vmem>>, vector<1x2x32xf32>
    %222 = vector.shape_cast %221 : vector<1x2x32xf32> to vector<2x32xf32>
    %223 = vector.shape_cast %215 : vector<2x32xf32> to vector<1x2x32xf32>
    tpu.vector_store %arg9[%220, %c0_70, %c0_71], %223 {strides = array<i32>} : memref<8x2x32xf32, #tpu.memory_space<vmem>>, vector<1x2x32xf32>,
    %c3_i32 = arith.constant 3 : i32
    %c7_i32_72 = arith.constant 7 : i32
    %224 = arith.subi %c7_i32_72, %c3_i32 : i32
    %c2_i32_73 = arith.constant 2 : i32
    %225 = arith.muli %c3_i32, %c2_i32_73 : i32
    %226 = arith.index_cast %225 : i32 to index
    %c0_74 = arith.constant 0 : index
    %227 = vector.load %arg6[%226, %c0_74] : memref<16x128xf32, #tpu.memory_space<vmem>>, vector<2x128xf32>
    %c0_75 = arith.constant 0 : index
    %c0_76 = arith.constant 0 : index
    %228 = vector.load %arg3[%c0_75, %c0_76] : memref<32x128xf32, #tpu.memory_space<vmem>>, vector<32x128xf32>
    %cst_77 = arith.constant dense<0.000000e+00> : vector<2x128xf32>
    %229 = tpu.matmul %190, %228, %cst_77 {dimension_numbers = #tpu.dot_dimension_numbers<[1], [0], [0], [1], [0, 0, 1, 1], [], []>} : vector<2x32xf32>, vector<32x128xf32>, vector<2x128xf32> -> vector<2x128xf32>
    %230 = arith.addf %227, %229 : vector<2x128xf32>
    %c2_i32_78 = arith.constant 2 : i32
    %231 = arith.muli %224, %c2_i32_78 : i32
    %232 = arith.index_cast %231 : i32 to index
    %c0_79 = arith.constant 0 : index
    %233 = vector.load %arg7[%232, %c0_79] : memref<16x128xf32, #tpu.memory_space<vmem>>, vector<2x128xf32>
    %c0_80 = arith.constant 0 : index
    %c0_81 = arith.constant 0 : index
    %234 = vector.load %arg4[%c0_80, %c0_81] : memref<32x128xf32, #tpu.memory_space<vmem>>, vector<32x128xf32>
    %cst_82 = arith.constant dense<0.000000e+00> : vector<2x128xf32>
    %235 = tpu.matmul %215, %234, %cst_82 {dimension_numbers = #tpu.dot_dimension_numbers<[1], [0], [0], [1], [0, 0, 1, 1], [], []>} : vector<2x32xf32>, vector<32x128xf32>, vector<2x128xf32> -> vector<2x128xf32>
    %236 = arith.addf %233, %235 : vector<2x128xf32>
    %237 = vector.extract_strided_slice %230 {offsets = [0, 0], sizes = [2, 32], strides = [1, 1]} : vector<2x128xf32> to vector<2x32xf32>
    %238 = arith.negf %237 : vector<2x32xf32>
    %239 = math.exp %238 : vector<2x32xf32>
    %cst_83 = arith.constant 1.000000e+00 : f32
    %240 = vector.broadcast %cst_83 : f32 to vector<2x32xf32>
    %241 = arith.addf %240, %239 : vector<2x32xf32>
    %242 = arith.divf %240, %241 : vector<2x32xf32>
    %243 = vector.extract_strided_slice %230 {offsets = [0, 32], sizes = [2, 32], strides = [1, 1]} : vector<2x128xf32> to vector<2x32xf32>
    %244 = arith.negf %243 : vector<2x32xf32>
    %245 = math.exp %244 : vector<2x32xf32>
    %cst_84 = arith.constant 1.000000e+00 : f32
    %246 = vector.broadcast %cst_84 : f32 to vector<2x32xf32>
    %247 = arith.addf %246, %245 : vector<2x32xf32>
    %248 = arith.divf %246, %247 : vector<2x32xf32>
    %249 = vector.extract_strided_slice %230 {offsets = [0, 64], sizes = [2, 32], strides = [1, 1]} : vector<2x128xf32> to vector<2x32xf32>
    %250 = math.tanh %249 : vector<2x32xf32>
    %251 = vector.extract_strided_slice %230 {offsets = [0, 96], sizes = [2, 32], strides = [1, 1]} : vector<2x128xf32> to vector<2x32xf32>
    %252 = arith.negf %251 : vector<2x32xf32>
    %253 = math.exp %252 : vector<2x32xf32>
    %cst_85 = arith.constant 1.000000e+00 : f32
    %254 = vector.broadcast %cst_85 : f32 to vector<2x32xf32>
    %255 = arith.addf %254, %253 : vector<2x32xf32>
    %256 = arith.divf %254, %255 : vector<2x32xf32>
    %257 = arith.mulf %248, %188 : vector<2x32xf32>
    %258 = arith.mulf %242, %250 : vector<2x32xf32>
    %259 = arith.addf %257, %258 : vector<2x32xf32>
    %260 = math.tanh %259 : vector<2x32xf32>
    %261 = arith.mulf %256, %260 : vector<2x32xf32>
    %262 = vector.extract_strided_slice %236 {offsets = [0, 0], sizes = [2, 32], strides = [1, 1]} : vector<2x128xf32> to vector<2x32xf32>
    %263 = arith.negf %262 : vector<2x32xf32>
    %264 = math.exp %263 : vector<2x32xf32>
    %cst_86 = arith.constant 1.000000e+00 : f32
    %265 = vector.broadcast %cst_86 : f32 to vector<2x32xf32>
    %266 = arith.addf %265, %264 : vector<2x32xf32>
    %267 = arith.divf %265, %266 : vector<2x32xf32>
    %268 = vector.extract_strided_slice %236 {offsets = [0, 32], sizes = [2, 32], strides = [1, 1]} : vector<2x128xf32> to vector<2x32xf32>
    %269 = arith.negf %268 : vector<2x32xf32>
    %270 = math.exp %269 : vector<2x32xf32>
    %cst_87 = arith.constant 1.000000e+00 : f32
    %271 = vector.broadcast %cst_87 : f32 to vector<2x32xf32>
    %272 = arith.addf %271, %270 : vector<2x32xf32>
    %273 = arith.divf %271, %272 : vector<2x32xf32>
    %274 = vector.extract_strided_slice %236 {offsets = [0, 64], sizes = [2, 32], strides = [1, 1]} : vector<2x128xf32> to vector<2x32xf32>
    %275 = math.tanh %274 : vector<2x32xf32>
    %276 = vector.extract_strided_slice %236 {offsets = [0, 96], sizes = [2, 32], strides = [1, 1]} : vector<2x128xf32> to vector<2x32xf32>
    %277 = arith.negf %276 : vector<2x32xf32>
    %278 = math.exp %277 : vector<2x32xf32>
    %cst_88 = arith.constant 1.000000e+00 : f32
    %279 = vector.broadcast %cst_88 : f32 to vector<2x32xf32>
    %280 = arith.addf %279, %278 : vector<2x32xf32>
    %281 = arith.divf %279, %280 : vector<2x32xf32>
    %282 = arith.mulf %273, %213 : vector<2x32xf32>
    %283 = arith.mulf %267, %275 : vector<2x32xf32>
    %284 = arith.addf %282, %283 : vector<2x32xf32>
    %285 = math.tanh %284 : vector<2x32xf32>
    %286 = arith.mulf %281, %285 : vector<2x32xf32>
    %287 = arith.index_cast %c3_i32 : i32 to index
    %c0_89 = arith.constant 0 : index
    %c0_90 = arith.constant 0 : index
    %288 = vector.load %arg8[%287, %c0_89, %c0_90] : memref<8x2x32xf32, #tpu.memory_space<vmem>>, vector<1x2x32xf32>
    %289 = vector.shape_cast %288 : vector<1x2x32xf32> to vector<2x32xf32>
    %290 = vector.shape_cast %261 : vector<2x32xf32> to vector<1x2x32xf32>
    tpu.vector_store %arg8[%287, %c0_89, %c0_90], %290 {strides = array<i32>} : memref<8x2x32xf32, #tpu.memory_space<vmem>>, vector<1x2x32xf32>,
    %291 = arith.index_cast %224 : i32 to index
    %c0_91 = arith.constant 0 : index
    %c0_92 = arith.constant 0 : index
    %292 = vector.load %arg9[%291, %c0_91, %c0_92] : memref<8x2x32xf32, #tpu.memory_space<vmem>>, vector<1x2x32xf32>
    %293 = vector.shape_cast %292 : vector<1x2x32xf32> to vector<2x32xf32>
    %294 = vector.shape_cast %286 : vector<2x32xf32> to vector<1x2x32xf32>
    tpu.vector_store %arg9[%291, %c0_91, %c0_92], %294 {strides = array<i32>} : memref<8x2x32xf32, #tpu.memory_space<vmem>>, vector<1x2x32xf32>,
    %c4_i32 = arith.constant 4 : i32
    %c7_i32_93 = arith.constant 7 : i32
    %295 = arith.subi %c7_i32_93, %c4_i32 : i32
    %c2_i32_94 = arith.constant 2 : i32
    %296 = arith.muli %c4_i32, %c2_i32_94 : i32
    %297 = arith.index_cast %296 : i32 to index
    %c0_95 = arith.constant 0 : index
    %298 = vector.load %arg6[%297, %c0_95] : memref<16x128xf32, #tpu.memory_space<vmem>>, vector<2x128xf32>
    %c0_96 = arith.constant 0 : index
    %c0_97 = arith.constant 0 : index
    %299 = vector.load %arg3[%c0_96, %c0_97] : memref<32x128xf32, #tpu.memory_space<vmem>>, vector<32x128xf32>
    %cst_98 = arith.constant dense<0.000000e+00> : vector<2x128xf32>
    %300 = tpu.matmul %261, %299, %cst_98 {dimension_numbers = #tpu.dot_dimension_numbers<[1], [0], [0], [1], [0, 0, 1, 1], [], []>} : vector<2x32xf32>, vector<32x128xf32>, vector<2x128xf32> -> vector<2x128xf32>
    %301 = arith.addf %298, %300 : vector<2x128xf32>
    %c2_i32_99 = arith.constant 2 : i32
    %302 = arith.muli %295, %c2_i32_99 : i32
    %303 = arith.index_cast %302 : i32 to index
    %c0_100 = arith.constant 0 : index
    %304 = vector.load %arg7[%303, %c0_100] : memref<16x128xf32, #tpu.memory_space<vmem>>, vector<2x128xf32>
    %c0_101 = arith.constant 0 : index
    %c0_102 = arith.constant 0 : index
    %305 = vector.load %arg4[%c0_101, %c0_102] : memref<32x128xf32, #tpu.memory_space<vmem>>, vector<32x128xf32>
    %cst_103 = arith.constant dense<0.000000e+00> : vector<2x128xf32>
    %306 = tpu.matmul %286, %305, %cst_103 {dimension_numbers = #tpu.dot_dimension_numbers<[1], [0], [0], [1], [0, 0, 1, 1], [], []>} : vector<2x32xf32>, vector<32x128xf32>, vector<2x128xf32> -> vector<2x128xf32>
    %307 = arith.addf %304, %306 : vector<2x128xf32>
    %308 = vector.extract_strided_slice %301 {offsets = [0, 0], sizes = [2, 32], strides = [1, 1]} : vector<2x128xf32> to vector<2x32xf32>
    %309 = arith.negf %308 : vector<2x32xf32>
    %310 = math.exp %309 : vector<2x32xf32>
    %cst_104 = arith.constant 1.000000e+00 : f32
    %311 = vector.broadcast %cst_104 : f32 to vector<2x32xf32>
    %312 = arith.addf %311, %310 : vector<2x32xf32>
    %313 = arith.divf %311, %312 : vector<2x32xf32>
    %314 = vector.extract_strided_slice %301 {offsets = [0, 32], sizes = [2, 32], strides = [1, 1]} : vector<2x128xf32> to vector<2x32xf32>
    %315 = arith.negf %314 : vector<2x32xf32>
    %316 = math.exp %315 : vector<2x32xf32>
    %cst_105 = arith.constant 1.000000e+00 : f32
    %317 = vector.broadcast %cst_105 : f32 to vector<2x32xf32>
    %318 = arith.addf %317, %316 : vector<2x32xf32>
    %319 = arith.divf %317, %318 : vector<2x32xf32>
    %320 = vector.extract_strided_slice %301 {offsets = [0, 64], sizes = [2, 32], strides = [1, 1]} : vector<2x128xf32> to vector<2x32xf32>
    %321 = math.tanh %320 : vector<2x32xf32>
    %322 = vector.extract_strided_slice %301 {offsets = [0, 96], sizes = [2, 32], strides = [1, 1]} : vector<2x128xf32> to vector<2x32xf32>
    %323 = arith.negf %322 : vector<2x32xf32>
    %324 = math.exp %323 : vector<2x32xf32>
    %cst_106 = arith.constant 1.000000e+00 : f32
    %325 = vector.broadcast %cst_106 : f32 to vector<2x32xf32>
    %326 = arith.addf %325, %324 : vector<2x32xf32>
    %327 = arith.divf %325, %326 : vector<2x32xf32>
    %328 = arith.mulf %319, %259 : vector<2x32xf32>
    %329 = arith.mulf %313, %321 : vector<2x32xf32>
    %330 = arith.addf %328, %329 : vector<2x32xf32>
    %331 = math.tanh %330 : vector<2x32xf32>
    %332 = arith.mulf %327, %331 : vector<2x32xf32>
    %333 = vector.extract_strided_slice %307 {offsets = [0, 0], sizes = [2, 32], strides = [1, 1]} : vector<2x128xf32> to vector<2x32xf32>
    %334 = arith.negf %333 : vector<2x32xf32>
    %335 = math.exp %334 : vector<2x32xf32>
    %cst_107 = arith.constant 1.000000e+00 : f32
    %336 = vector.broadcast %cst_107 : f32 to vector<2x32xf32>
    %337 = arith.addf %336, %335 : vector<2x32xf32>
    %338 = arith.divf %336, %337 : vector<2x32xf32>
    %339 = vector.extract_strided_slice %307 {offsets = [0, 32], sizes = [2, 32], strides = [1, 1]} : vector<2x128xf32> to vector<2x32xf32>
    %340 = arith.negf %339 : vector<2x32xf32>
    %341 = math.exp %340 : vector<2x32xf32>
    %cst_108 = arith.constant 1.000000e+00 : f32
    %342 = vector.broadcast %cst_108 : f32 to vector<2x32xf32>
    %343 = arith.addf %342, %341 : vector<2x32xf32>
    %344 = arith.divf %342, %343 : vector<2x32xf32>
    %345 = vector.extract_strided_slice %307 {offsets = [0, 64], sizes = [2, 32], strides = [1, 1]} : vector<2x128xf32> to vector<2x32xf32>
    %346 = math.tanh %345 : vector<2x32xf32>
    %347 = vector.extract_strided_slice %307 {offsets = [0, 96], sizes = [2, 32], strides = [1, 1]} : vector<2x128xf32> to vector<2x32xf32>
    %348 = arith.negf %347 : vector<2x32xf32>
    %349 = math.exp %348 : vector<2x32xf32>
    %cst_109 = arith.constant 1.000000e+00 : f32
    %350 = vector.broadcast %cst_109 : f32 to vector<2x32xf32>
    %351 = arith.addf %350, %349 : vector<2x32xf32>
    %352 = arith.divf %350, %351 : vector<2x32xf32>
    %353 = arith.mulf %344, %284 : vector<2x32xf32>
    %354 = arith.mulf %338, %346 : vector<2x32xf32>
    %355 = arith.addf %353, %354 : vector<2x32xf32>
    %356 = math.tanh %355 : vector<2x32xf32>
    %357 = arith.mulf %352, %356 : vector<2x32xf32>
    %358 = arith.index_cast %c4_i32 : i32 to index
    %c0_110 = arith.constant 0 : index
    %c0_111 = arith.constant 0 : index
    %359 = vector.load %arg8[%358, %c0_110, %c0_111] : memref<8x2x32xf32, #tpu.memory_space<vmem>>, vector<1x2x32xf32>
    %360 = vector.shape_cast %359 : vector<1x2x32xf32> to vector<2x32xf32>
    %361 = vector.shape_cast %332 : vector<2x32xf32> to vector<1x2x32xf32>
    tpu.vector_store %arg8[%358, %c0_110, %c0_111], %361 {strides = array<i32>} : memref<8x2x32xf32, #tpu.memory_space<vmem>>, vector<1x2x32xf32>,
    %362 = arith.index_cast %295 : i32 to index
    %c0_112 = arith.constant 0 : index
    %c0_113 = arith.constant 0 : index
    %363 = vector.load %arg9[%362, %c0_112, %c0_113] : memref<8x2x32xf32, #tpu.memory_space<vmem>>, vector<1x2x32xf32>
    %364 = vector.shape_cast %363 : vector<1x2x32xf32> to vector<2x32xf32>
    %365 = vector.shape_cast %357 : vector<2x32xf32> to vector<1x2x32xf32>
    tpu.vector_store %arg9[%362, %c0_112, %c0_113], %365 {strides = array<i32>} : memref<8x2x32xf32, #tpu.memory_space<vmem>>, vector<1x2x32xf32>,
    %c5_i32 = arith.constant 5 : i32
    %c7_i32_114 = arith.constant 7 : i32
    %366 = arith.subi %c7_i32_114, %c5_i32 : i32
    %c2_i32_115 = arith.constant 2 : i32
    %367 = arith.muli %c5_i32, %c2_i32_115 : i32
    %368 = arith.index_cast %367 : i32 to index
    %c0_116 = arith.constant 0 : index
    %369 = vector.load %arg6[%368, %c0_116] : memref<16x128xf32, #tpu.memory_space<vmem>>, vector<2x128xf32>
    %c0_117 = arith.constant 0 : index
    %c0_118 = arith.constant 0 : index
    %370 = vector.load %arg3[%c0_117, %c0_118] : memref<32x128xf32, #tpu.memory_space<vmem>>, vector<32x128xf32>
    %cst_119 = arith.constant dense<0.000000e+00> : vector<2x128xf32>
    %371 = tpu.matmul %332, %370, %cst_119 {dimension_numbers = #tpu.dot_dimension_numbers<[1], [0], [0], [1], [0, 0, 1, 1], [], []>} : vector<2x32xf32>, vector<32x128xf32>, vector<2x128xf32> -> vector<2x128xf32>
    %372 = arith.addf %369, %371 : vector<2x128xf32>
    %c2_i32_120 = arith.constant 2 : i32
    %373 = arith.muli %366, %c2_i32_120 : i32
    %374 = arith.index_cast %373 : i32 to index
    %c0_121 = arith.constant 0 : index
    %375 = vector.load %arg7[%374, %c0_121] : memref<16x128xf32, #tpu.memory_space<vmem>>, vector<2x128xf32>
    %c0_122 = arith.constant 0 : index
    %c0_123 = arith.constant 0 : index
    %376 = vector.load %arg4[%c0_122, %c0_123] : memref<32x128xf32, #tpu.memory_space<vmem>>, vector<32x128xf32>
    %cst_124 = arith.constant dense<0.000000e+00> : vector<2x128xf32>
    %377 = tpu.matmul %357, %376, %cst_124 {dimension_numbers = #tpu.dot_dimension_numbers<[1], [0], [0], [1], [0, 0, 1, 1], [], []>} : vector<2x32xf32>, vector<32x128xf32>, vector<2x128xf32> -> vector<2x128xf32>
    %378 = arith.addf %375, %377 : vector<2x128xf32>
    %379 = vector.extract_strided_slice %372 {offsets = [0, 0], sizes = [2, 32], strides = [1, 1]} : vector<2x128xf32> to vector<2x32xf32>
    %380 = arith.negf %379 : vector<2x32xf32>
    %381 = math.exp %380 : vector<2x32xf32>
    %cst_125 = arith.constant 1.000000e+00 : f32
    %382 = vector.broadcast %cst_125 : f32 to vector<2x32xf32>
    %383 = arith.addf %382, %381 : vector<2x32xf32>
    %384 = arith.divf %382, %383 : vector<2x32xf32>
    %385 = vector.extract_strided_slice %372 {offsets = [0, 32], sizes = [2, 32], strides = [1, 1]} : vector<2x128xf32> to vector<2x32xf32>
    %386 = arith.negf %385 : vector<2x32xf32>
    %387 = math.exp %386 : vector<2x32xf32>
    %cst_126 = arith.constant 1.000000e+00 : f32
    %388 = vector.broadcast %cst_126 : f32 to vector<2x32xf32>
    %389 = arith.addf %388, %387 : vector<2x32xf32>
    %390 = arith.divf %388, %389 : vector<2x32xf32>
    %391 = vector.extract_strided_slice %372 {offsets = [0, 64], sizes = [2, 32], strides = [1, 1]} : vector<2x128xf32> to vector<2x32xf32>
    %392 = math.tanh %391 : vector<2x32xf32>
    %393 = vector.extract_strided_slice %372 {offsets = [0, 96], sizes = [2, 32], strides = [1, 1]} : vector<2x128xf32> to vector<2x32xf32>
    %394 = arith.negf %393 : vector<2x32xf32>
    %395 = math.exp %394 : vector<2x32xf32>
    %cst_127 = arith.constant 1.000000e+00 : f32
    %396 = vector.broadcast %cst_127 : f32 to vector<2x32xf32>
    %397 = arith.addf %396, %395 : vector<2x32xf32>
    %398 = arith.divf %396, %397 : vector<2x32xf32>
    %399 = arith.mulf %390, %330 : vector<2x32xf32>
    %400 = arith.mulf %384, %392 : vector<2x32xf32>
    %401 = arith.addf %399, %400 : vector<2x32xf32>
    %402 = math.tanh %401 : vector<2x32xf32>
    %403 = arith.mulf %398, %402 : vector<2x32xf32>
    %404 = vector.extract_strided_slice %378 {offsets = [0, 0], sizes = [2, 32], strides = [1, 1]} : vector<2x128xf32> to vector<2x32xf32>
    %405 = arith.negf %404 : vector<2x32xf32>
    %406 = math.exp %405 : vector<2x32xf32>
    %cst_128 = arith.constant 1.000000e+00 : f32
    %407 = vector.broadcast %cst_128 : f32 to vector<2x32xf32>
    %408 = arith.addf %407, %406 : vector<2x32xf32>
    %409 = arith.divf %407, %408 : vector<2x32xf32>
    %410 = vector.extract_strided_slice %378 {offsets = [0, 32], sizes = [2, 32], strides = [1, 1]} : vector<2x128xf32> to vector<2x32xf32>
    %411 = arith.negf %410 : vector<2x32xf32>
    %412 = math.exp %411 : vector<2x32xf32>
    %cst_129 = arith.constant 1.000000e+00 : f32
    %413 = vector.broadcast %cst_129 : f32 to vector<2x32xf32>
    %414 = arith.addf %413, %412 : vector<2x32xf32>
    %415 = arith.divf %413, %414 : vector<2x32xf32>
    %416 = vector.extract_strided_slice %378 {offsets = [0, 64], sizes = [2, 32], strides = [1, 1]} : vector<2x128xf32> to vector<2x32xf32>
    %417 = math.tanh %416 : vector<2x32xf32>
    %418 = vector.extract_strided_slice %378 {offsets = [0, 96], sizes = [2, 32], strides = [1, 1]} : vector<2x128xf32> to vector<2x32xf32>
    %419 = arith.negf %418 : vector<2x32xf32>
    %420 = math.exp %419 : vector<2x32xf32>
    %cst_130 = arith.constant 1.000000e+00 : f32
    %421 = vector.broadcast %cst_130 : f32 to vector<2x32xf32>
    %422 = arith.addf %421, %420 : vector<2x32xf32>
    %423 = arith.divf %421, %422 : vector<2x32xf32>
    %424 = arith.mulf %415, %355 : vector<2x32xf32>
    %425 = arith.mulf %409, %417 : vector<2x32xf32>
    %426 = arith.addf %424, %425 : vector<2x32xf32>
    %427 = math.tanh %426 : vector<2x32xf32>
    %428 = arith.mulf %423, %427 : vector<2x32xf32>
    %429 = arith.index_cast %c5_i32 : i32 to index
    %c0_131 = arith.constant 0 : index
    %c0_132 = arith.constant 0 : index
    %430 = vector.load %arg8[%429, %c0_131, %c0_132] : memref<8x2x32xf32, #tpu.memory_space<vmem>>, vector<1x2x32xf32>
    %431 = vector.shape_cast %430 : vector<1x2x32xf32> to vector<2x32xf32>
    %432 = vector.shape_cast %403 : vector<2x32xf32> to vector<1x2x32xf32>
    tpu.vector_store %arg8[%429, %c0_131, %c0_132], %432 {strides = array<i32>} : memref<8x2x32xf32, #tpu.memory_space<vmem>>, vector<1x2x32xf32>,
    %433 = arith.index_cast %366 : i32 to index
    %c0_133 = arith.constant 0 : index
    %c0_134 = arith.constant 0 : index
    %434 = vector.load %arg9[%433, %c0_133, %c0_134] : memref<8x2x32xf32, #tpu.memory_space<vmem>>, vector<1x2x32xf32>
    %435 = vector.shape_cast %434 : vector<1x2x32xf32> to vector<2x32xf32>
    %436 = vector.shape_cast %428 : vector<2x32xf32> to vector<1x2x32xf32>
    tpu.vector_store %arg9[%433, %c0_133, %c0_134], %436 {strides = array<i32>} : memref<8x2x32xf32, #tpu.memory_space<vmem>>, vector<1x2x32xf32>,
    %c6_i32 = arith.constant 6 : i32
    %c7_i32_135 = arith.constant 7 : i32
    %437 = arith.subi %c7_i32_135, %c6_i32 : i32
    %c2_i32_136 = arith.constant 2 : i32
    %438 = arith.muli %c6_i32, %c2_i32_136 : i32
    %439 = arith.index_cast %438 : i32 to index
    %c0_137 = arith.constant 0 : index
    %440 = vector.load %arg6[%439, %c0_137] : memref<16x128xf32, #tpu.memory_space<vmem>>, vector<2x128xf32>
    %c0_138 = arith.constant 0 : index
    %c0_139 = arith.constant 0 : index
    %441 = vector.load %arg3[%c0_138, %c0_139] : memref<32x128xf32, #tpu.memory_space<vmem>>, vector<32x128xf32>
    %cst_140 = arith.constant dense<0.000000e+00> : vector<2x128xf32>
    %442 = tpu.matmul %403, %441, %cst_140 {dimension_numbers = #tpu.dot_dimension_numbers<[1], [0], [0], [1], [0, 0, 1, 1], [], []>} : vector<2x32xf32>, vector<32x128xf32>, vector<2x128xf32> -> vector<2x128xf32>
    %443 = arith.addf %440, %442 : vector<2x128xf32>
    %c2_i32_141 = arith.constant 2 : i32
    %444 = arith.muli %437, %c2_i32_141 : i32
    %445 = arith.index_cast %444 : i32 to index
    %c0_142 = arith.constant 0 : index
    %446 = vector.load %arg7[%445, %c0_142] : memref<16x128xf32, #tpu.memory_space<vmem>>, vector<2x128xf32>
    %c0_143 = arith.constant 0 : index
    %c0_144 = arith.constant 0 : index
    %447 = vector.load %arg4[%c0_143, %c0_144] : memref<32x128xf32, #tpu.memory_space<vmem>>, vector<32x128xf32>
    %cst_145 = arith.constant dense<0.000000e+00> : vector<2x128xf32>
    %448 = tpu.matmul %428, %447, %cst_145 {dimension_numbers = #tpu.dot_dimension_numbers<[1], [0], [0], [1], [0, 0, 1, 1], [], []>} : vector<2x32xf32>, vector<32x128xf32>, vector<2x128xf32> -> vector<2x128xf32>
    %449 = arith.addf %446, %448 : vector<2x128xf32>
    %450 = vector.extract_strided_slice %443 {offsets = [0, 0], sizes = [2, 32], strides = [1, 1]} : vector<2x128xf32> to vector<2x32xf32>
    %451 = arith.negf %450 : vector<2x32xf32>
    %452 = math.exp %451 : vector<2x32xf32>
    %cst_146 = arith.constant 1.000000e+00 : f32
    %453 = vector.broadcast %cst_146 : f32 to vector<2x32xf32>
    %454 = arith.addf %453, %452 : vector<2x32xf32>
    %455 = arith.divf %453, %454 : vector<2x32xf32>
    %456 = vector.extract_strided_slice %443 {offsets = [0, 32], sizes = [2, 32], strides = [1, 1]} : vector<2x128xf32> to vector<2x32xf32>
    %457 = arith.negf %456 : vector<2x32xf32>
    %458 = math.exp %457 : vector<2x32xf32>
    %cst_147 = arith.constant 1.000000e+00 : f32
    %459 = vector.broadcast %cst_147 : f32 to vector<2x32xf32>
    %460 = arith.addf %459, %458 : vector<2x32xf32>
    %461 = arith.divf %459, %460 : vector<2x32xf32>
    %462 = vector.extract_strided_slice %443 {offsets = [0, 64], sizes = [2, 32], strides = [1, 1]} : vector<2x128xf32> to vector<2x32xf32>
    %463 = math.tanh %462 : vector<2x32xf32>
    %464 = vector.extract_strided_slice %443 {offsets = [0, 96], sizes = [2, 32], strides = [1, 1]} : vector<2x128xf32> to vector<2x32xf32>
    %465 = arith.negf %464 : vector<2x32xf32>
    %466 = math.exp %465 : vector<2x32xf32>
    %cst_148 = arith.constant 1.000000e+00 : f32
    %467 = vector.broadcast %cst_148 : f32 to vector<2x32xf32>
    %468 = arith.addf %467, %466 : vector<2x32xf32>
    %469 = arith.divf %467, %468 : vector<2x32xf32>
    %470 = arith.mulf %461, %401 : vector<2x32xf32>
    %471 = arith.mulf %455, %463 : vector<2x32xf32>
    %472 = arith.addf %470, %471 : vector<2x32xf32>
    %473 = math.tanh %472 : vector<2x32xf32>
    %474 = arith.mulf %469, %473 : vector<2x32xf32>
    %475 = vector.extract_strided_slice %449 {offsets = [0, 0], sizes = [2, 32], strides = [1, 1]} : vector<2x128xf32> to vector<2x32xf32>
    %476 = arith.negf %475 : vector<2x32xf32>
    %477 = math.exp %476 : vector<2x32xf32>
    %cst_149 = arith.constant 1.000000e+00 : f32
    %478 = vector.broadcast %cst_149 : f32 to vector<2x32xf32>
    %479 = arith.addf %478, %477 : vector<2x32xf32>
    %480 = arith.divf %478, %479 : vector<2x32xf32>
    %481 = vector.extract_strided_slice %449 {offsets = [0, 32], sizes = [2, 32], strides = [1, 1]} : vector<2x128xf32> to vector<2x32xf32>
    %482 = arith.negf %481 : vector<2x32xf32>
    %483 = math.exp %482 : vector<2x32xf32>
    %cst_150 = arith.constant 1.000000e+00 : f32
    %484 = vector.broadcast %cst_150 : f32 to vector<2x32xf32>
    %485 = arith.addf %484, %483 : vector<2x32xf32>
    %486 = arith.divf %484, %485 : vector<2x32xf32>
    %487 = vector.extract_strided_slice %449 {offsets = [0, 64], sizes = [2, 32], strides = [1, 1]} : vector<2x128xf32> to vector<2x32xf32>
    %488 = math.tanh %487 : vector<2x32xf32>
    %489 = vector.extract_strided_slice %449 {offsets = [0, 96], sizes = [2, 32], strides = [1, 1]} : vector<2x128xf32> to vector<2x32xf32>
    %490 = arith.negf %489 : vector<2x32xf32>
    %491 = math.exp %490 : vector<2x32xf32>
    %cst_151 = arith.constant 1.000000e+00 : f32
    %492 = vector.broadcast %cst_151 : f32 to vector<2x32xf32>
    %493 = arith.addf %492, %491 : vector<2x32xf32>
    %494 = arith.divf %492, %493 : vector<2x32xf32>
    %495 = arith.mulf %486, %426 : vector<2x32xf32>
    %496 = arith.mulf %480, %488 : vector<2x32xf32>
    %497 = arith.addf %495, %496 : vector<2x32xf32>
    %498 = math.tanh %497 : vector<2x32xf32>
    %499 = arith.mulf %494, %498 : vector<2x32xf32>
    %500 = arith.index_cast %c6_i32 : i32 to index
    %c0_152 = arith.constant 0 : index
    %c0_153 = arith.constant 0 : index
    %501 = vector.load %arg8[%500, %c0_152, %c0_153] : memref<8x2x32xf32, #tpu.memory_space<vmem>>, vector<1x2x32xf32>
    %502 = vector.shape_cast %501 : vector<1x2x32xf32> to vector<2x32xf32>
    %503 = vector.shape_cast %474 : vector<2x32xf32> to vector<1x2x32xf32>
    tpu.vector_store %arg8[%500, %c0_152, %c0_153], %503 {strides = array<i32>} : memref<8x2x32xf32, #tpu.memory_space<vmem>>, vector<1x2x32xf32>,
    %504 = arith.index_cast %437 : i32 to index
    %c0_154 = arith.constant 0 : index
    %c0_155 = arith.constant 0 : index
    %505 = vector.load %arg9[%504, %c0_154, %c0_155] : memref<8x2x32xf32, #tpu.memory_space<vmem>>, vector<1x2x32xf32>
    %506 = vector.shape_cast %505 : vector<1x2x32xf32> to vector<2x32xf32>
    %507 = vector.shape_cast %499 : vector<2x32xf32> to vector<1x2x32xf32>
    tpu.vector_store %arg9[%504, %c0_154, %c0_155], %507 {strides = array<i32>} : memref<8x2x32xf32, #tpu.memory_space<vmem>>, vector<1x2x32xf32>,
    %c7_i32_156 = arith.constant 7 : i32
    %c7_i32_157 = arith.constant 7 : i32
    %508 = arith.subi %c7_i32_157, %c7_i32_156 : i32
    %c2_i32_158 = arith.constant 2 : i32
    %509 = arith.muli %c7_i32_156, %c2_i32_158 : i32
    %510 = arith.index_cast %509 : i32 to index
    %c0_159 = arith.constant 0 : index
    %511 = vector.load %arg6[%510, %c0_159] : memref<16x128xf32, #tpu.memory_space<vmem>>, vector<2x128xf32>
    %c0_160 = arith.constant 0 : index
    %c0_161 = arith.constant 0 : index
    %512 = vector.load %arg3[%c0_160, %c0_161] : memref<32x128xf32, #tpu.memory_space<vmem>>, vector<32x128xf32>
    %cst_162 = arith.constant dense<0.000000e+00> : vector<2x128xf32>
    %513 = tpu.matmul %474, %512, %cst_162 {dimension_numbers = #tpu.dot_dimension_numbers<[1], [0], [0], [1], [0, 0, 1, 1], [], []>} : vector<2x32xf32>, vector<32x128xf32>, vector<2x128xf32> -> vector<2x128xf32>
    %514 = arith.addf %511, %513 : vector<2x128xf32>
    %c2_i32_163 = arith.constant 2 : i32
    %515 = arith.muli %508, %c2_i32_163 : i32
    %516 = arith.index_cast %515 : i32 to index
    %c0_164 = arith.constant 0 : index
    %517 = vector.load %arg7[%516, %c0_164] : memref<16x128xf32, #tpu.memory_space<vmem>>, vector<2x128xf32>
    %c0_165 = arith.constant 0 : index
    %c0_166 = arith.constant 0 : index
    %518 = vector.load %arg4[%c0_165, %c0_166] : memref<32x128xf32, #tpu.memory_space<vmem>>, vector<32x128xf32>
    %cst_167 = arith.constant dense<0.000000e+00> : vector<2x128xf32>
    %519 = tpu.matmul %499, %518, %cst_167 {dimension_numbers = #tpu.dot_dimension_numbers<[1], [0], [0], [1], [0, 0, 1, 1], [], []>} : vector<2x32xf32>, vector<32x128xf32>, vector<2x128xf32> -> vector<2x128xf32>
    %520 = arith.addf %517, %519 : vector<2x128xf32>
    %521 = vector.extract_strided_slice %514 {offsets = [0, 0], sizes = [2, 32], strides = [1, 1]} : vector<2x128xf32> to vector<2x32xf32>
    %522 = arith.negf %521 : vector<2x32xf32>
    %523 = math.exp %522 : vector<2x32xf32>
    %cst_168 = arith.constant 1.000000e+00 : f32
    %524 = vector.broadcast %cst_168 : f32 to vector<2x32xf32>
    %525 = arith.addf %524, %523 : vector<2x32xf32>
    %526 = arith.divf %524, %525 : vector<2x32xf32>
    %527 = vector.extract_strided_slice %514 {offsets = [0, 32], sizes = [2, 32], strides = [1, 1]} : vector<2x128xf32> to vector<2x32xf32>
    %528 = arith.negf %527 : vector<2x32xf32>
    %529 = math.exp %528 : vector<2x32xf32>
    %cst_169 = arith.constant 1.000000e+00 : f32
    %530 = vector.broadcast %cst_169 : f32 to vector<2x32xf32>
    %531 = arith.addf %530, %529 : vector<2x32xf32>
    %532 = arith.divf %530, %531 : vector<2x32xf32>
    %533 = vector.extract_strided_slice %514 {offsets = [0, 64], sizes = [2, 32], strides = [1, 1]} : vector<2x128xf32> to vector<2x32xf32>
    %534 = math.tanh %533 : vector<2x32xf32>
    %535 = vector.extract_strided_slice %514 {offsets = [0, 96], sizes = [2, 32], strides = [1, 1]} : vector<2x128xf32> to vector<2x32xf32>
    %536 = arith.negf %535 : vector<2x32xf32>
    %537 = math.exp %536 : vector<2x32xf32>
    %cst_170 = arith.constant 1.000000e+00 : f32
    %538 = vector.broadcast %cst_170 : f32 to vector<2x32xf32>
    %539 = arith.addf %538, %537 : vector<2x32xf32>
    %540 = arith.divf %538, %539 : vector<2x32xf32>
    %541 = arith.mulf %532, %472 : vector<2x32xf32>
    %542 = arith.mulf %526, %534 : vector<2x32xf32>
    %543 = arith.addf %541, %542 : vector<2x32xf32>
    %544 = math.tanh %543 : vector<2x32xf32>
    %545 = arith.mulf %540, %544 : vector<2x32xf32>
    %546 = vector.extract_strided_slice %520 {offsets = [0, 0], sizes = [2, 32], strides = [1, 1]} : vector<2x128xf32> to vector<2x32xf32>
    %547 = arith.negf %546 : vector<2x32xf32>
    %548 = math.exp %547 : vector<2x32xf32>
    %cst_171 = arith.constant 1.000000e+00 : f32
    %549 = vector.broadcast %cst_171 : f32 to vector<2x32xf32>
    %550 = arith.addf %549, %548 : vector<2x32xf32>
    %551 = arith.divf %549, %550 : vector<2x32xf32>
    %552 = vector.extract_strided_slice %520 {offsets = [0, 32], sizes = [2, 32], strides = [1, 1]} : vector<2x128xf32> to vector<2x32xf32>
    %553 = arith.negf %552 : vector<2x32xf32>
    %554 = math.exp %553 : vector<2x32xf32>
    %cst_172 = arith.constant 1.000000e+00 : f32
    %555 = vector.broadcast %cst_172 : f32 to vector<2x32xf32>
    %556 = arith.addf %555, %554 : vector<2x32xf32>
    %557 = arith.divf %555, %556 : vector<2x32xf32>
    %558 = vector.extract_strided_slice %520 {offsets = [0, 64], sizes = [2, 32], strides = [1, 1]} : vector<2x128xf32> to vector<2x32xf32>
    %559 = math.tanh %558 : vector<2x32xf32>
    %560 = vector.extract_strided_slice %520 {offsets = [0, 96], sizes = [2, 32], strides = [1, 1]} : vector<2x128xf32> to vector<2x32xf32>
    %561 = arith.negf %560 : vector<2x32xf32>
    %562 = math.exp %561 : vector<2x32xf32>
    %cst_173 = arith.constant 1.000000e+00 : f32
    %563 = vector.broadcast %cst_173 : f32 to vector<2x32xf32>
    %564 = arith.addf %563, %562 : vector<2x32xf32>
    %565 = arith.divf %563, %564 : vector<2x32xf32>
    %566 = arith.mulf %557, %497 : vector<2x32xf32>
    %567 = arith.mulf %551, %559 : vector<2x32xf32>
    %568 = arith.addf %566, %567 : vector<2x32xf32>
    %569 = math.tanh %568 : vector<2x32xf32>
    %570 = arith.mulf %565, %569 : vector<2x32xf32>
    %571 = arith.index_cast %c7_i32_156 : i32 to index
    %c0_174 = arith.constant 0 : index
    %c0_175 = arith.constant 0 : index
    %572 = vector.load %arg8[%571, %c0_174, %c0_175] : memref<8x2x32xf32, #tpu.memory_space<vmem>>, vector<1x2x32xf32>
    %573 = vector.shape_cast %572 : vector<1x2x32xf32> to vector<2x32xf32>
    %574 = vector.shape_cast %545 : vector<2x32xf32> to vector<1x2x32xf32>
    tpu.vector_store %arg8[%571, %c0_174, %c0_175], %574 {strides = array<i32>} : memref<8x2x32xf32, #tpu.memory_space<vmem>>, vector<1x2x32xf32>,
    %575 = arith.index_cast %508 : i32 to index
    %c0_176 = arith.constant 0 : index
    %c0_177 = arith.constant 0 : index
    %576 = vector.load %arg9[%575, %c0_176, %c0_177] : memref<8x2x32xf32, #tpu.memory_space<vmem>>, vector<1x2x32xf32>
    %577 = vector.shape_cast %576 : vector<1x2x32xf32> to vector<2x32xf32>
    %578 = vector.shape_cast %570 : vector<2x32xf32> to vector<1x2x32xf32>
    tpu.vector_store %arg9[%575, %c0_176, %c0_177], %578 {strides = array<i32>} : memref<8x2x32xf32, #tpu.memory_space<vmem>>, vector<1x2x32xf32>,
    %c8_i32 = arith.constant 8 : i32
    %c0_178 = arith.constant 0 : index
    %c0_179 = arith.constant 0 : index
    %c0_180 = arith.constant 0 : index
    %579 = vector.load %arg8[%c0_178, %c0_179, %c0_180] : memref<8x2x32xf32, #tpu.memory_space<vmem>>, vector<8x2x32xf32>
    %c0_181 = arith.constant 0 : index
    %c0_182 = arith.constant 0 : index
    %c0_183 = arith.constant 0 : index
    %580 = vector.load %arg5[%c0_181, %c0_182, %c0_183] : memref<8x2x64xf32, #tpu.memory_space<vmem>>, vector<8x2x32xf32>
    tpu.vector_store %arg5[%c0_181, %c0_182, %c0_183], %579 {strides = array<i32>} : memref<8x2x64xf32, #tpu.memory_space<vmem>>, vector<8x2x32xf32>,
    %c0_184 = arith.constant 0 : index
    %c0_185 = arith.constant 0 : index
    %c0_186 = arith.constant 0 : index
    %581 = vector.load %arg9[%c0_184, %c0_185, %c0_186] : memref<8x2x32xf32, #tpu.memory_space<vmem>>, vector<8x2x32xf32>
    %c0_187 = arith.constant 0 : index
    %c0_188 = arith.constant 0 : index
    %c32 = arith.constant 32 : index
    %582 = vector.load %arg5[%c0_187, %c0_188, %c32] : memref<8x2x64xf32, #tpu.memory_space<vmem>>, vector<8x2x32xf32>
    tpu.vector_store %arg5[%c0_187, %c0_188, %c32], %581 {strides = array<i32>} : memref<8x2x64xf32, #tpu.memory_space<vmem>>, vector<8x2x32xf32>,
    return
  }
}

</mosaic_0001>

<llo_original>
// kernel: tpu_custom_call.1
$region0: #{tpu_custom_call.1}
  #allocation0 [shape = 'u32[]', space=smem, size = 0x4, offset = 0x4, fixed_abs, tag = 'smem constant byte address 0x4 - core index']
  #allocation1 [shape = 'u32[144,128]{1,0:T(1,128)}', space=vmem, size = 0x12000, scoped, tag = 'internal scratch']
  #allocation2 [shape = 'f32[16,128]{1,0:T(8,128)}', space=vmem, size = 0x2000, scoped, tag = 'scratch operand']
  #allocation3 [shape = 'f32[16,128]{1,0:T(8,128)}', space=vmem, size = 0x2000, scoped, tag = 'scratch operand']
  #allocation4 [shape = 'f32[8,2,32]{2,1,0:T(2,128)}', space=vmem, size = 0x2000, scoped, tag = 'scratch operand']
  #allocation5 [shape = 'f32[8,2,32]{2,1,0:T(2,128)}', space=vmem, size = 0x2000, scoped, tag = 'scratch operand']
  %s0 = inlined_call_operand.hbm [shape: f32[16,32], index: 0, kind: input, shape index: {}]
  %s1 = inlined_call_operand.hbm [shape: f32[32,256], index: 1, kind: input, shape index: {}]
  %s2 = inlined_call_operand.vmem [shape: f32[1,256], index: 2, kind: input, shape index: {}]
  %s3 = inlined_call_operand.hbm [shape: f32[32,128], index: 3, kind: input, shape index: {}]
  %s4 = inlined_call_operand.hbm [shape: f32[32,128], index: 4, kind: input, shape index: {}]
  %s5 = inlined_call_operand.hbm [shape: f32[8,2,64], index: 5, kind: output, shape index: {}]
  %s6 = sld [smem:[#allocation0]]
  $region46: #{tpu_custom_call.1} parent=0
    _
  %s8 = ssub.s32 1, %s6
  %s9 = scalar_select 0, %s8, %s6
  $region1: #{tpu_custom_call.1} parent=0
    #allocation6 [shape = 'u8[8192]{0}', space=vmem, size = 0x2000, scoped, tag = 'input window, operand 0, single buffered']
    #allocation7 [shape = 's32[1]{0}', space=sflag, size = 0x4, scoped, tag = 'scoped memory for tpu_custom_call.1']
    #allocation8 [shape = 's32[1]{0}', space=sflag, size = 0x4, scoped, tag = 'scoped memory for tpu_custom_call.1']
    #allocation9 [shape = 'u8[32768]{0}', space=vmem, size = 0x8000, scoped, tag = 'input window, operand 1, single buffered']
    #allocation10 [shape = 's32[1]{0}', space=sflag, size = 0x4, scoped, tag = 'scoped memory for tpu_custom_call.1']
    #allocation11 [shape = 'u8[16384]{0}', space=vmem, size = 0x4000, scoped, tag = 'input window, operand 3, single buffered']
    #allocation12 [shape = 'u8[16384]{0}', space=vmem, size = 0x4000, scoped, tag = 'input window, operand 4, single buffered']
    #allocation13 [shape = 's32[1]{0}', space=sflag, size = 0x4, scoped, tag = 'scoped memory for tpu_custom_call.1']
    #allocation14 [shape = 'u8[8192]{0}', space=vmem, size = 0x2000, scoped, tag = 'output window, operand 0, single buffered']
    %10 = vsyncpa [#allocation7], 0
    %11 = vsyncpa [#allocation10], 0
    %12 = vsyncpa [#allocation13], 0
    %13 = vsyncpa [#allocation8], 0
    // Predicated region
    $region2: #{tpu_custom_call.1} parent=1 // pred_check
      _
    $region3: #{tpu_custom_call.1} parent=1 // pred_check_branch
      %15 = sbr.rel (0) target = $region5
    $region4: #{tpu_custom_call.1} parent=1 // pred_region
      %s17 = ssub.s32 256, 256
      %18 = vsyncadd [#allocation7], %s17
      %s19 = sshll.u32 [#allocation6], 4
      %s20 = int_to_ptr.vmem [resolvable:$true] %s19
      %25 = dma.hbm_to_vmem [thread:$0]  %s0, 256, %s20, [#allocation7], 128, 128, 8
    $region5: #{tpu_custom_call.1} parent=1 // pred_fallthru
      _
    // Predicated region
    $region6: #{tpu_custom_call.1} parent=1 // pred_check
      _
    $region7: #{tpu_custom_call.1} parent=1 // pred_check_branch
      %27 = sbr.rel (0) target = $region9
    $region8: #{tpu_custom_call.1} parent=1 // pred_region
      %s29 = ssub.s32 1024, 1024
      %30 = vsyncadd [#allocation10], %s29
      %s31 = sshll.u32 [#allocation9], 4
      %s32 = int_to_ptr.vmem [resolvable:$true] %s31
      %37 = dma.hbm_to_vmem [thread:$0]  %s1, 1024, %s32, [#allocation10], 256, 256, 16
    $region9: #{tpu_custom_call.1} parent=1 // pred_fallthru
      _
    // Predicated region
    $region10: #{tpu_custom_call.1} parent=1 // pred_check
      _
    $region11: #{tpu_custom_call.1} parent=1 // pred_check_branch
      %39 = sbr.rel (0) target = $region13
    $region12: #{tpu_custom_call.1} parent=1 // pred_region
      _
    $region13: #{tpu_custom_call.1} parent=1 // pred_fallthru
      _
    // Predicated region
    $region14: #{tpu_custom_call.1} parent=1 // pred_check
      _
    $region15: #{tpu_custom_call.1} parent=1 // pred_check_branch
      %41 = sbr.rel (0) target = $region17
    $region16: #{tpu_custom_call.1} parent=1 // pred_region
      %s43 = ssub.s32 512, 512
      %44 = vsyncadd [#allocation10], %s43
      %s45 = sshll.u32 [#allocation11], 4
      %s46 = int_to_ptr.vmem [resolvable:$true] %s45
      %51 = dma.hbm_to_vmem [thread:$0]  %s3, 512, %s46, [#allocation10], 128, 128, 8
    $region17: #{tpu_custom_call.1} parent=1 // pred_fallthru
      _
    // Predicated region
    $region18: #{tpu_custom_call.1} parent=1 // pred_check
      _
    $region19: #{tpu_custom_call.1} parent=1 // pred_check_branch
      %53 = sbr.rel (0) target = $region21
    $region20: #{tpu_custom_call.1} parent=1 // pred_region
      %s55 = ssub.s32 512, 512
      %56 = vsyncadd [#allocation13], %s55
      %s57 = sshll.u32 [#allocation12], 4
      %s58 = int_to_ptr.vmem [resolvable:$true] %s57
      %63 = dma.hbm_to_vmem [thread:$0]  %s4, 512, %s58, [#allocation13], 128, 128, 8
    $region21: #{tpu_custom_call.1} parent=1 // pred_fallthru
      _
    // Predicated region
    $region22: #{tpu_custom_call.1} parent=1 // pred_check
      _
    $region23: #{tpu_custom_call.1} parent=1 // pred_check_branch
      %65 = sbr.rel (0) target = $region25
    $region24: #{tpu_custom_call.1} parent=1 // pred_region
      %66 = dma.done [#allocation7], 256
    $region25: #{tpu_custom_call.1} parent=1 // pred_fallthru
      _
    // Predicated region
    $region26: #{tpu_custom_call.1} parent=1 // pred_check
      _
    $region27: #{tpu_custom_call.1} parent=1 // pred_check_branch
      %68 = sbr.rel (0) target = $region29
    $region28: #{tpu_custom_call.1} parent=1 // pred_region
      %69 = dma.done [#allocation10], 1024
    $region29: #{tpu_custom_call.1} parent=1 // pred_fallthru
      _
    // Predicated region
    $region30: #{tpu_custom_call.1} parent=1 // pred_check
      _
    $region31: #{tpu_custom_call.1} parent=1 // pred_check_branch
      %71 = sbr.rel (0) target = $region33
    $region32: #{tpu_custom_call.1} parent=1 // pred_region
      %72 = dma.done [#allocation10], 512
    $region33: #{tpu_custom_call.1} parent=1 // pred_fallthru
      _
    // Predicated region
    $region34: #{tpu_custom_call.1} parent=1 // pred_check
      _
    $region35: #{tpu_custom_call.1} parent=1 // pred_check_branch
      %74 = sbr.rel (0) target = $region37
    $region36: #{tpu_custom_call.1} parent=1 // pred_region
      %75 = dma.done [#allocation13], 512
    $region37: #{tpu_custom_call.1} parent=1 // pred_fallthru
      _
    %v76 = vld [vmem:[#allocation6] sm:$0xff]
    %v77 = vld [vmem:[#allocation6 + $0x8] sm:$0xff]
    %v78 = vld [vmem:[#allocation9] sm:$0xff]
    %v79 = vld [vmem:[#allocation9 + $0x8] sm:$0xff]
    %v80 = vld [vmem:[#allocation9 + $0x10] sm:$0xff]
    %v81 = vld [vmem:[#allocation9 + $0x18] sm:$0xff]
    %v82 = vld [vmem:[#allocation9 + $0x20] sm:$0xff]
    %v83 = vld [vmem:[#allocation9 + $0x28] sm:$0xff]
    %v84 = vld [vmem:[#allocation9 + $0x30] sm:$0xff]
    %v85 = vld [vmem:[#allocation9 + $0x38] sm:$0xff]
    %v86 = vld [vmem:[%s2] sm:$0x3]
    %v88 = vlaneseq
    %v89 = vshrl.u32 %v88, 7
    %v90 = vsub.s32 0, %v89
    %v91 = vrot.slane %v86, %v90
    %v92 = vlaneseq
    %v93 = vshrl.u32 %v92, 7
    %v94 = vsub.s32 1, %v93
    %v95 = vrot.slane %v86, %v94
    %vm98 = vcmask 261120
    %v100 = vsel %vm98, %v76, 0
    %v103 = vsel %vm98, %v77, 0
    %105 = vmatprep.subr.mxu0 %v79
    %106 = vmatpush1.msra.mxu0 %v78
    %107 = vmatprep.subr.mxu0 %v81
    %108 = vmatpush1.msra.mxu0 %v80
    %109 = vmatprep.subr.mxu0 %v83
    %110 = vmatpush1.msra.mxu0 %v82
    %111 = vmatprep.subr.mxu0 %v85
    %112 = vmatpush1.msra.mxu0 %v84
    %113 = vmatprep.subr.mxu0 0.0
    %114 = vmatpush1.msra.mxu0 0.0
    %115 = vmatprep.subr.mxu0 0.0
    %116 = vmatpush1.msra.mxu0 0.0
    %117 = vmatprep.subr.mxu0 0.0
    %118 = vmatpush1.msra.mxu0 0.0
    %119 = vmatprep.subr.mxu0 0.0
    %120 = vmatpush1.msra.mxu0 0.0
    %121 = vmatprep.subr.mxu0 0.0
    %122 = vmatpush1.msra.mxu0 0.0
    %123 = vmatprep.subr.mxu0 0.0
    %124 = vmatpush1.msra.mxu0 0.0
    %125 = vmatprep.subr.mxu0 0.0
    %126 = vmatpush1.msra.mxu0 0.0
    %127 = vmatprep.subr.mxu0 0.0
    %128 = vmatpush1.msra.mxu0 0.0
    %129 = vmatprep.subr.mxu0 0.0
    %130 = vmatpush1.msra.mxu0 0.0
    %131 = vmatprep.subr.mxu0 0.0
    %132 = vmatpush1.msra.mxu0 0.0
    %133 = vmatprep.subr.mxu0 0.0
    %134 = vmatpush1.msra.mxu0 0.0
    %135 = vmatprep.subr.mxu0 0.0
    %136 = vmatpush1.msra.mxu0 0.0
    %137 = vmatprep.subr.mxu0 0.0
    %138 = vmatpush1.msra.mxu0 0.0
    %139 = vmatprep.subr.mxu0 0.0
    %140 = vmatpush1.msra.mxu0 0.0
    %141 = vmatprep.subr.mxu0 0.0
    %142 = vmatpush1.msra.mxu0 0.0
    %143 = vmatprep.subr.mxu0 0.0
    %144 = vmatpush1.msra.mxu0 0.0
    %145 = vmatprep.subr.mxu0 0.0
    %146 = vmatpush1.msra.mxu0 0.0
    %147 = vmatprep.subr.mxu0 0.0
    %148 = vmatpush1.msra.mxu0 0.0
    %149 = vmatprep.subr.mxu0 0.0
    %150 = vmatpush1.msra.mxu0 0.0
    %151 = vmatprep.subr.mxu0 0.0
    %152 = vmatpush1.msra.mxu0 0.0
    %153 = vmatprep.subr.mxu0 0.0
    %154 = vmatpush1.msra.mxu0 0.0
    %155 = vmatprep.subr.mxu0 0.0
    %156 = vmatpush1.msra.mxu0 0.0
    %157 = vmatprep.subr.mxu0 0.0
    %158 = vmatpush1.msra.mxu0 0.0
    %159 = vmatprep.subr.mxu0 0.0
    %160 = vmatpush1.msra.mxu0 0.0
    %161 = vmatprep.subr.mxu0 0.0
    %162 = vmatpush1.msra.mxu0 0.0
    %163 = vmatprep.subr.mxu0 0.0
    %164 = vmatpush1.msra.mxu0 0.0
    %165 = vmatprep.subr.mxu0 0.0
    %166 = vmatpush1.msra.mxu0 0.0
    %167 = vmatprep.subr.mxu0 0.0
    %168 = vmatpush1.msra.mxu0 0.0
    %169 = vmatprep.mubr.f32.mxu0 0.0
    %170 = vmatmul.mubr.f32.gmra.mrb[0].mxu0 %v100
    %v171 = vpop.f32.mrb[0].mxu0
    %v172 = vadd.f32 %v91, %v171
    %v173 = vpop.f32.mrb[0].mxu0
    %v174 = vadd.f32 %v95, %v173
    %175 = vmatprep.mubr.f32.mxu0 0.0
    %176 = vmatmul.mubr.f32.gmra.mrb[0].mxu0 %v103
    %v177 = vpop.f32.mrb[0].mxu0
    %v178 = vadd.f32 %v91, %v177
    %v179 = vpop.f32.mrb[0].mxu0
    %v180 = vadd.f32 %v95, %v179
    %181 = vdwg.mxu0
    %182 = vst [vmem:[#allocation2] sm:$0xff] %v172
    %183 = vst [vmem:[#allocation2 + $0x8] sm:$0xff] %v178
    %184 = vst [vmem:[#allocation3] sm:$0xff] %v174
    %185 = vst [vmem:[#allocation3 + $0x8] sm:$0xff] %v180
    %v186 = vld [vmem:[#allocation2] sm:$0x3]
    %v187 = vld [vmem:[#allocation11] sm:$0xff]
    %v188 = vld [vmem:[#allocation11 + $0x8] sm:$0xff]
    %v189 = vld [vmem:[#allocation11 + $0x10] sm:$0xff]
    %v190 = vld [vmem:[#allocation11 + $0x18] sm:$0xff]
    %v192 = vsel %vm98, 0.0, 0
    %194 = vmatprep.subr.mxu0 0.0
    %195 = vmatpush1.msra.mxu0 %v187
    %196 = vmatprep.subr.mxu0 0.0
    %197 = vmatpush1.msra.mxu0 %v188
    %198 = vmatprep.subr.mxu0 0.0
    %199 = vmatpush1.msra.mxu0 %v189
    %200 = vmatprep.subr.mxu0 0.0
    %201 = vmatpush1.msra.mxu0 %v190
    %202 = vmatprep.subr.mxu0 0.0
    %203 = vmatpush1.msra.mxu0 0.0
    %204 = vmatprep.subr.mxu0 0.0
    %205 = vmatpush1.msra.mxu0 0.0
    %206 = vmatprep.subr.mxu0 0.0
    %207 = vmatpush1.msra.mxu0 0.0
    %208 = vmatprep.subr.mxu0 0.0
    %209 = vmatpush1.msra.mxu0 0.0
    %210 = vmatprep.subr.mxu0 0.0
    %211 = vmatpush1.msra.mxu0 0.0
    %212 = vmatprep.subr.mxu0 0.0
    %213 = vmatpush1.msra.mxu0 0.0
    %214 = vmatprep.subr.mxu0 0.0
    %215 = vmatpush1.msra.mxu0 0.0
    %216 = vmatprep.subr.mxu0 0.0
    %217 = vmatpush1.msra.mxu0 0.0
    %218 = vmatprep.subr.mxu0 0.0
    %219 = vmatpush1.msra.mxu0 0.0
    %220 = vmatprep.subr.mxu0 0.0
    %221 = vmatpush1.msra.mxu0 0.0
    %222 = vmatprep.subr.mxu0 0.0
    %223 = vmatpush1.msra.mxu0 0.0
    %224 = vmatprep.subr.mxu0 0.0
    %225 = vmatpush1.msra.mxu0 0.0
    %226 = vmatprep.subr.mxu0 0.0
    %227 = vmatpush1.msra.mxu0 0.0
    %228 = vmatprep.subr.mxu0 0.0
    %229 = vmatpush1.msra.mxu0 0.0
    %230 = vmatprep.subr.mxu0 0.0
    %231 = vmatpush1.msra.mxu0 0.0
    %232 = vmatprep.subr.mxu0 0.0
    %233 = vmatpush1.msra.mxu0 0.0
    %234 = vmatprep.subr.mxu0 0.0
    %235 = vmatpush1.msra.mxu0 0.0
    %236 = vmatprep.subr.mxu0 0.0
    %237 = vmatpush1.msra.mxu0 0.0
    %238 = vmatprep.subr.mxu0 0.0
    %239 = vmatpush1.msra.mxu0 0.0
    %240 = vmatprep.subr.mxu0 0.0
    %241 = vmatpush1.msra.mxu0 0.0
    %242 = vmatprep.subr.mxu0 0.0
    %243 = vmatpush1.msra.mxu0 0.0
    %244 = vmatprep.subr.mxu0 0.0
    %245 = vmatpush1.msra.mxu0 0.0
    %246 = vmatprep.subr.mxu0 0.0
    %247 = vmatpush1.msra.mxu0 0.0
    %248 = vmatprep.subr.mxu0 0.0
    %249 = vmatpush1.msra.mxu0 0.0
    %250 = vmatprep.subr.mxu0 0.0
    %251 = vmatpush1.msra.mxu0 0.0
    %252 = vmatprep.subr.mxu0 0.0
    %253 = vmatpush1.msra.mxu0 0.0
    %254 = vmatprep.subr.mxu0 0.0
    %255 = vmatpush1.msra.mxu0 0.0
    %256 = vmatprep.subr.mxu0 0.0
    %257 = vmatpush1.msra.mxu0 0.0
    %258 = vmatprep.mubr.f32.mxu0 0.0
    %259 = vmatmul.mubr.f32.gmra.mrb[0].mxu0 %v192
    %v260 = vpop.f32.mrb[0].mxu0
    %v261 = vadd.f32 0.0, %v260
    %v262 = vpop.f32.mrb[0].mxu0
    %263 = vdwg.mxu0
    %v264 = vadd.f32 %v186, %v261
    %v265 = vld [vmem:[#allocation3 + $0xe] sm:$0x3]
    %v266 = vld [vmem:[#allocation12] sm:$0xff]
    %v267 = vld [vmem:[#allocation12 + $0x8] sm:$0xff]
    %v268 = vld [vmem:[#allocation12 + $0x10] sm:$0xff]
    %v269 = vld [vmem:[#allocation12 + $0x18] sm:$0xff]
    %270 = vmatprep.subr.mxu0 0.0
    %271 = vmatpush1.msra.mxu0 %v266
    %272 = vmatprep.subr.mxu0 0.0
    %273 = vmatpush1.msra.mxu0 %v267
    %274 = vmatprep.subr.mxu0 0.0
    %275 = vmatpush1.msra.mxu0 %v268
    %276 = vmatprep.subr.mxu0 0.0
    %277 = vmatpush1.msra.mxu0 %v269
    %278 = vmatprep.subr.mxu0 0.0
    %279 = vmatpush1.msra.mxu0 0.0
    %280 = vmatprep.subr.mxu0 0.0
    %281 = vmatpush1.msra.mxu0 0.0
    %282 = vmatprep.subr.mxu0 0.0
    %283 = vmatpush1.msra.mxu0 0.0
    %284 = vmatprep.subr.mxu0 0.0
    %285 = vmatpush1.msra.mxu0 0.0
    %286 = vmatprep.subr.mxu0 0.0
    %287 = vmatpush1.msra.mxu0 0.0
    %288 = vmatprep.subr.mxu0 0.0
    %289 = vmatpush1.msra.mxu0 0.0
    %290 = vmatprep.subr.mxu0 0.0
    %291 = vmatpush1.msra.mxu0 0.0
    %292 = vmatprep.subr.mxu0 0.0
    %293 = vmatpush1.msra.mxu0 0.0
    %294 = vmatprep.subr.mxu0 0.0
    %295 = vmatpush1.msra.mxu0 0.0
    %296 = vmatprep.subr.mxu0 0.0
    %297 = vmatpush1.msra.mxu0 0.0
    %298 = vmatprep.subr.mxu0 0.0
    %299 = vmatpush1.msra.mxu0 0.0
    %300 = vmatprep.subr.mxu0 0.0
    %301 = vmatpush1.msra.mxu0 0.0
    %302 = vmatprep.subr.mxu0 0.0
    %303 = vmatpush1.msra.mxu0 0.0
    %304 = vmatprep.subr.mxu0 0.0
    %305 = vmatpush1.msra.mxu0 0.0
    %306 = vmatprep.subr.mxu0 0.0
    %307 = vmatpush1.msra.mxu0 0.0
    %308 = vmatprep.subr.mxu0 0.0
    %309 = vmatpush1.msra.mxu0 0.0
    %310 = vmatprep.subr.mxu0 0.0
    %311 = vmatpush1.msra.mxu0 0.0
    %312 = vmatprep.subr.mxu0 0.0
    %313 = vmatpush1.msra.mxu0 0.0
    %314 = vmatprep.subr.mxu0 0.0
    %315 = vmatpush1.msra.mxu0 0.0
    %316 = vmatprep.subr.mxu0 0.0
    %317 = vmatpush1.msra.mxu0 0.0
    %318 = vmatprep.subr.mxu0 0.0
    %319 = vmatpush1.msra.mxu0 0.0
    %320 = vmatprep.subr.mxu0 0.0
    %321 = vmatpush1.msra.mxu0 0.0
    %322 = vmatprep.subr.mxu0 0.0
    %323 = vmatpush1.msra.mxu0 0.0
    %324 = vmatprep.subr.mxu0 0.0
    %325 = vmatpush1.msra.mxu0 0.0
    %326 = vmatprep.subr.mxu0 0.0
    %327 = vmatpush1.msra.mxu0 0.0
    %328 = vmatprep.subr.mxu0 0.0
    %329 = vmatpush1.msra.mxu0 0.0
    %330 = vmatprep.subr.mxu0 0.0
    %331 = vmatpush1.msra.mxu0 0.0
    %332 = vmatprep.subr.mxu0 0.0
    %333 = vmatpush1.msra.mxu0 0.0
    %334 = vmatprep.mubr.f32.mxu0 0.0
    %335 = vmatmul.mubr.f32.gmra.mrb[0].mxu0 %v192
    %v336 = vpop.f32.mrb[0].mxu0
    %v337 = vadd.f32 0.0, %v336
    %v338 = vpop.f32.mrb[0].mxu0
    %339 = vdwg.mxu0
    %v340 = vadd.f32 %v265, %v337
    %v341 = vxor.u32 %v264, 2147483648
    %v342 = vmul.f32 %v341, 1.442695
    %v343 = vpow.pop %v342
    %v344 = vadd.f32 %v343, 1.0
    %v345 = vrcp.pop %v344
    %v346 = vmul.f32 1.0, %v345
    %v347 = vtanh.pop %v264
    %v348 = vmul.f32 %v346, 0.0
    %350 = vrot.lane.b32.xlu0 %v347, 64
    %v351 = vpop.permute.xlu0 %350
    %v353 = vmul.f32 %v346, %v351
    %355 = vrot.lane.b32.xlu0 %v353, 32
    %v356 = vpop.permute.xlu0 %355
    %v358 = vadd.f32 %v348, %v356
    %v359 = vtanh.pop %v358
    %361 = vrot.lane.b32.xlu0 %v359, 64
    %v362 = vpop.permute.xlu0 %361
    %v364 = vmul.f32 %v346, %v362
    %v365 = vxor.u32 %v340, 2147483648
    %v366 = vmul.f32 %v365, 1.442695
    %v367 = vpow.pop %v366
    %v368 = vadd.f32 %v367, 1.0
    %v369 = vrcp.pop %v368
    %v370 = vmul.f32 1.0, %v369
    %v371 = vtanh.pop %v340
    %v372 = vmul.f32 %v370, 0.0
    %374 = vrot.lane.b32.xlu0 %v371, 64
    %v375 = vpop.permute.xlu0 %374
    %v377 = vmul.f32 %v370, %v375
    %379 = vrot.lane.b32.xlu0 %v377, 32
    %v380 = vpop.permute.xlu0 %379
    %v382 = vadd.f32 %v372, %v380
    %v383 = vtanh.pop %v382
    %385 = vrot.lane.b32.xlu0 %v383, 64
    %v386 = vpop.permute.xlu0 %385
    %v388 = vmul.f32 %v370, %v386
    %390 = vrot.lane.b32.xlu0 %v364, 32
    %v391 = vpop.permute.xlu0 %390
    %vm393 = vcmask 254976
    %394 = vst.msk [vmem:[#allocation4] sm:$0x3] %vm393, %v391
    %396 = vrot.lane.b32.xlu0 %v388, 32
    %v397 = vpop.permute.xlu0 %396
    %s399 = scalar_lea.vmem [#allocation5], 14
    %400 = vst.msk [vmem:[%s399] sm:$0x3] %vm393, %v397
    %v401 = vld [vmem:[#allocation2 + $0x2] sm:$0x3]
    %v402 = vld [vmem:[#allocation11] sm:$0xff]
    %v403 = vld [vmem:[#allocation11 + $0x8] sm:$0xff]
    %v404 = vld [vmem:[#allocation11 + $0x10] sm:$0xff]
    %v405 = vld [vmem:[#allocation11 + $0x18] sm:$0xff]
    %v406 = vsel %vm98, %v391, 0
    %408 = vmatprep.subr.mxu0 0.0
    %409 = vmatpush1.msra.mxu0 %v402
    %410 = vmatprep.subr.mxu0 0.0
    %411 = vmatpush1.msra.mxu0 %v403
    %412 = vmatprep.subr.mxu0 0.0
    %413 = vmatpush1.msra.mxu0 %v404
    %414 = vmatprep.subr.mxu0 0.0
    %415 = vmatpush1.msra.mxu0 %v405
    %416 = vmatprep.subr.mxu0 0.0
    %417 = vmatpush1.msra.mxu0 0.0
    %418 = vmatprep.subr.mxu0 0.0
    %419 = vmatpush1.msra.mxu0 0.0
    %420 = vmatprep.subr.mxu0 0.0
    %421 = vmatpush1.msra.mxu0 0.0
    %422 = vmatprep.subr.mxu0 0.0
    %423 = vmatpush1.msra.mxu0 0.0
    %424 = vmatprep.subr.mxu0 0.0
    %425 = vmatpush1.msra.mxu0 0.0
    %426 = vmatprep.subr.mxu0 0.0
    %427 = vmatpush1.msra.mxu0 0.0
    %428 = vmatprep.subr.mxu0 0.0
    %429 = vmatpush1.msra.mxu0 0.0
    %430 = vmatprep.subr.mxu0 0.0
    %431 = vmatpush1.msra.mxu0 0.0
    %432 = vmatprep.subr.mxu0 0.0
    %433 = vmatpush1.msra.mxu0 0.0
    %434 = vmatprep.subr.mxu0 0.0
    %435 = vmatpush1.msra.mxu0 0.0
    %436 = vmatprep.subr.mxu0 0.0
    %437 = vmatpush1.msra.mxu0 0.0
    %438 = vmatprep.subr.mxu0 0.0
    %439 = vmatpush1.msra.mxu0 0.0
    %440 = vmatprep.subr.mxu0 0.0
    %441 = vmatpush1.msra.mxu0 0.0
    %442 = vmatprep.subr.mxu0 0.0
    %443 = vmatpush1.msra.mxu0 0.0
    %444 = vmatprep.subr.mxu0 0.0
    %445 = vmatpush1.msra.mxu0 0.0
    %446 = vmatprep.subr.mxu0 0.0
    %447 = vmatpush1.msra.mxu0 0.0
    %448 = vmatprep.subr.mxu0 0.0
    %449 = vmatpush1.msra.mxu0 0.0
    %450 = vmatprep.subr.mxu0 0.0
    %451 = vmatpush1.msra.mxu0 0.0
    %452 = vmatprep.subr.mxu0 0.0
    %453 = vmatpush1.msra.mxu0 0.0
    %454 = vmatprep.subr.mxu0 0.0
    %455 = vmatpush1.msra.mxu0 0.0
    %456 = vmatprep.subr.mxu0 0.0
    %457 = vmatpush1.msra.mxu0 0.0
    %458 = vmatprep.subr.mxu0 0.0
    %459 = vmatpush1.msra.mxu0 0.0
    %460 = vmatprep.subr.mxu0 0.0
    %461 = vmatpush1.msra.mxu0 0.0
    %462 = vmatprep.subr.mxu0 0.0
    %463 = vmatpush1.msra.mxu0 0.0
    %464 = vmatprep.subr.mxu0 0.0
    %465 = vmatpush1.msra.mxu0 0.0
    %466 = vmatprep.subr.mxu0 0.0
    %467 = vmatpush1.msra.mxu0 0.0
    %468 = vmatprep.subr.mxu0 0.0
    %469 = vmatpush1.msra.mxu0 0.0
    %470 = vmatprep.subr.mxu0 0.0
    %471 = vmatpush1.msra.mxu0 0.0
    %472 = vmatprep.mubr.f32.mxu0 0.0
    %473 = vmatmul.mubr.f32.gmra.mrb[0].mxu0 %v406
    %v474 = vpop.f32.mrb[0].mxu0
    %v475 = vadd.f32 0.0, %v474
    %v476 = vpop.f32.mrb[0].mxu0
    %477 = vdwg.mxu0
    %v478 = vadd.f32 %v401, %v475
    %v479 = vld [vmem:[#allocation3 + $0xc] sm:$0x3]
    %v480 = vld [vmem:[#allocation12] sm:$0xff]
    %v481 = vld [vmem:[#allocation12 + $0x8] sm:$0xff]
    %v482 = vld [vmem:[#allocation12 + $0x10] sm:$0xff]
    %v483 = vld [vmem:[#allocation12 + $0x18] sm:$0xff]
    %v484 = vsel %vm98, %v397, 0
    %486 = vmatprep.subr.mxu0 0.0
    %487 = vmatpush1.msra.mxu0 %v480
    %488 = vmatprep.subr.mxu0 0.0
    %489 = vmatpush1.msra.mxu0 %v481
    %490 = vmatprep.subr.mxu0 0.0
    %491 = vmatpush1.msra.mxu0 %v482
    %492 = vmatprep.subr.mxu0 0.0
    %493 = vmatpush1.msra.mxu0 %v483
    %494 = vmatprep.subr.mxu0 0.0
    %495 = vmatpush1.msra.mxu0 0.0
    %496 = vmatprep.subr.mxu0 0.0
    %497 = vmatpush1.msra.mxu0 0.0
    %498 = vmatprep.subr.mxu0 0.0
    %499 = vmatpush1.msra.mxu0 0.0
    %500 = vmatprep.subr.mxu0 0.0
    %501 = vmatpush1.msra.mxu0 0.0
    %502 = vmatprep.subr.mxu0 0.0
    %503 = vmatpush1.msra.mxu0 0.0
    %504 = vmatprep.subr.mxu0 0.0
    %505 = vmatpush1.msra.mxu0 0.0
    %506 = vmatprep.subr.mxu0 0.0
    %507 = vmatpush1.msra.mxu0 0.0
    %508 = vmatprep.subr.mxu0 0.0
    %509 = vmatpush1.msra.mxu0 0.0
    %510 = vmatprep.subr.mxu0 0.0
    %511 = vmatpush1.msra.mxu0 0.0
    %512 = vmatprep.subr.mxu0 0.0
    %513 = vmatpush1.msra.mxu0 0.0
    %514 = vmatprep.subr.mxu0 0.0
    %515 = vmatpush1.msra.mxu0 0.0
    %516 = vmatprep.subr.mxu0 0.0
    %517 = vmatpush1.msra.mxu0 0.0
    %518 = vmatprep.subr.mxu0 0.0
    %519 = vmatpush1.msra.mxu0 0.0
    %520 = vmatprep.subr.mxu0 0.0
    %521 = vmatpush1.msra.mxu0 0.0
    %522 = vmatprep.subr.mxu0 0.0
    %523 = vmatpush1.msra.mxu0 0.0
    %524 = vmatprep.subr.mxu0 0.0
    %525 = vmatpush1.msra.mxu0 0.0
    %526 = vmatprep.subr.mxu0 0.0
    %527 = vmatpush1.msra.mxu0 0.0
    %528 = vmatprep.subr.mxu0 0.0
    %529 = vmatpush1.msra.mxu0 0.0
    %530 = vmatprep.subr.mxu0 0.0
    %531 = vmatpush1.msra.mxu0 0.0
    %532 = vmatprep.subr.mxu0 0.0
    %533 = vmatpush1.msra.mxu0 0.0
    %534 = vmatprep.subr.mxu0 0.0
    %535 = vmatpush1.msra.mxu0 0.0
    %536 = vmatprep.subr.mxu0 0.0
    %537 = vmatpush1.msra.mxu0 0.0
    %538 = vmatprep.subr.mxu0 0.0
    %539 = vmatpush1.msra.mxu0 0.0
    %540 = vmatprep.subr.mxu0 0.0
    %541 = vmatpush1.msra.mxu0 0.0
    %542 = vmatprep.subr.mxu0 0.0
    %543 = vmatpush1.msra.mxu0 0.0
    %544 = vmatprep.subr.mxu0 0.0
    %545 = vmatpush1.msra.mxu0 0.0
    %546 = vmatprep.subr.mxu0 0.0
    %547 = vmatpush1.msra.mxu0 0.0
    %548 = vmatprep.subr.mxu0 0.0
    %549 = vmatpush1.msra.mxu0 0.0
    %550 = vmatprep.mubr.f32.mxu0 0.0
    %551 = vmatmul.mubr.f32.gmra.mrb[0].mxu0 %v484
    %v552 = vpop.f32.mrb[0].mxu0
    %v553 = vadd.f32 0.0, %v552
    %v554 = vpop.f32.mrb[0].mxu0
    %555 = vdwg.mxu0
    %v556 = vadd.f32 %v479, %v553
    %v557 = vxor.u32 %v478, 2147483648
    %v558 = vmul.f32 %v557, 1.442695
    %v559 = vpow.pop %v558
    %v560 = vadd.f32 %v559, 1.0
    %v561 = vrcp.pop %v560
    %v562 = vmul.f32 1.0, %v561
    %v563 = vtanh.pop %v478
    %v564 = vmul.f32 %v562, %v358
    %566 = vrot.lane.b32.xlu0 %v563, 64
    %v567 = vpop.permute.xlu0 %566
    %v569 = vmul.f32 %v562, %v567
    %571 = vrot.lane.b32.xlu0 %v569, 32
    %v572 = vpop.permute.xlu0 %571
    %v574 = vadd.f32 %v564, %v572
    %v575 = vtanh.pop %v574
    %577 = vrot.lane.b32.xlu0 %v575, 64
    %v578 = vpop.permute.xlu0 %577
    %v580 = vmul.f32 %v562, %v578
    %v581 = vxor.u32 %v556, 2147483648
    %v582 = vmul.f32 %v581, 1.442695
    %v583 = vpow.pop %v582
    %v584 = vadd.f32 %v583, 1.0
    %v585 = vrcp.pop %v584
    %v586 = vmul.f32 1.0, %v585
    %v587 = vtanh.pop %v556
    %v588 = vmul.f32 %v586, %v382
    %590 = vrot.lane.b32.xlu0 %v587, 64
    %v591 = vpop.permute.xlu0 %590
    %v593 = vmul.f32 %v586, %v591
    %595 = vrot.lane.b32.xlu0 %v593, 32
    %v596 = vpop.permute.xlu0 %595
    %v598 = vadd.f32 %v588, %v596
    %v599 = vtanh.pop %v598
    %601 = vrot.lane.b32.xlu0 %v599, 64
    %v602 = vpop.permute.xlu0 %601
    %v604 = vmul.f32 %v586, %v602
    %606 = vrot.lane.b32.xlu0 %v580, 32
    %v607 = vpop.permute.xlu0 %606
    %s609 = scalar_lea.vmem [#allocation4], 2
    %610 = vst.msk [vmem:[%s609] sm:$0x3] %vm393, %v607
    %612 = vrot.lane.b32.xlu0 %v604, 32
    %v613 = vpop.permute.xlu0 %612
    %s615 = scalar_lea.vmem [#allocation5], 12
    %616 = vst.msk [vmem:[%s615] sm:$0x3] %vm393, %v613
    %v617 = vld [vmem:[#allocation2 + $0x4] sm:$0x3]
    %v618 = vld [vmem:[#allocation11] sm:$0xff]
    %v619 = vld [vmem:[#allocation11 + $0x8] sm:$0xff]
    %v620 = vld [vmem:[#allocation11 + $0x10] sm:$0xff]
    %v621 = vld [vmem:[#allocation11 + $0x18] sm:$0xff]
    %v622 = vsel %vm98, %v607, 0
    %624 = vmatprep.subr.mxu0 0.0
    %625 = vmatpush1.msra.mxu0 %v618
    %626 = vmatprep.subr.mxu0 0.0
    %627 = vmatpush1.msra.mxu0 %v619
    %628 = vmatprep.subr.mxu0 0.0
    %629 = vmatpush1.msra.mxu0 %v620
    %630 = vmatprep.subr.mxu0 0.0
    %631 = vmatpush1.msra.mxu0 %v621
    %632 = vmatprep.subr.mxu0 0.0
    %633 = vmatpush1.msra.mxu0 0.0
    %634 = vmatprep.subr.mxu0 0.0
    %635 = vmatpush1.msra.mxu0 0.0
    %636 = vmatprep.subr.mxu0 0.0
    %637 = vmatpush1.msra.mxu0 0.0
    %638 = vmatprep.subr.mxu0 0.0
    %639 = vmatpush1.msra.mxu0 0.0
    %640 = vmatprep.subr.mxu0 0.0
    %641 = vmatpush1.msra.mxu0 0.0
    %642 = vmatprep.subr.mxu0 0.0
    %643 = vmatpush1.msra.mxu0 0.0
    %644 = vmatprep.subr.mxu0 0.0
    %645 = vmatpush1.msra.mxu0 0.0
    %646 = vmatprep.subr.mxu0 0.0
    %647 = vmatpush1.msra.mxu0 0.0
    %648 = vmatprep.subr.mxu0 0.0
    %649 = vmatpush1.msra.mxu0 0.0
    %650 = vmatprep.subr.mxu0 0.0
    %651 = vmatpush1.msra.mxu0 0.0
    %652 = vmatprep.subr.mxu0 0.0
    %653 = vmatpush1.msra.mxu0 0.0
    %654 = vmatprep.subr.mxu0 0.0
    %655 = vmatpush1.msra.mxu0 0.0
    %656 = vmatprep.subr.mxu0 0.0
    %657 = vmatpush1.msra.mxu0 0.0
    %658 = vmatprep.subr.mxu0 0.0
    %659 = vmatpush1.msra.mxu0 0.0
    %660 = vmatprep.subr.mxu0 0.0
    %661 = vmatpush1.msra.mxu0 0.0
    %662 = vmatprep.subr.mxu0 0.0
    %663 = vmatpush1.msra.mxu0 0.0
    %664 = vmatprep.subr.mxu0 0.0
    %665 = vmatpush1.msra.mxu0 0.0
    %666 = vmatprep.subr.mxu0 0.0
    %667 = vmatpush1.msra.mxu0 0.0
    %668 = vmatprep.subr.mxu0 0.0
    %669 = vmatpush1.msra.mxu0 0.0
    %670 = vmatprep.subr.mxu0 0.0
    %671 = vmatpush1.msra.mxu0 0.0
    %672 = vmatprep.subr.mxu0 0.0
    %673 = vmatpush1.msra.mxu0 0.0
    %674 = vmatprep.subr.mxu0 0.0
    %675 = vmatpush1.msra.mxu0 0.0
    %676 = vmatprep.subr.mxu0 0.0
    %677 = vmatpush1.msra.mxu0 0.0
    %678 = vmatprep.subr.mxu0 0.0
    %679 = vmatpush1.msra.mxu0 0.0
    %680 = vmatprep.subr.mxu0 0.0
    %681 = vmatpush1.msra.mxu0 0.0
    %682 = vmatprep.subr.mxu0 0.0
    %683 = vmatpush1.msra.mxu0 0.0
    %684 = vmatprep.subr.mxu0 0.0
    %685 = vmatpush1.msra.mxu0 0.0
    %686 = vmatprep.subr.mxu0 0.0
    %687 = vmatpush1.msra.mxu0 0.0
    %688 = vmatprep.mubr.f32.mxu0 0.0
    %689 = vmatmul.mubr.f32.gmra.mrb[0].mxu0 %v622
    %v690 = vpop.f32.mrb[0].mxu0
    %v691 = vadd.f32 0.0, %v690
    %v692 = vpop.f32.mrb[0].mxu0
    %693 = vdwg.mxu0
    %v694 = vadd.f32 %v617, %v691
    %v695 = vld [vmem:[#allocation3 + $0xa] sm:$0x3]
    %v696 = vld [vmem:[#allocation12] sm:$0xff]
    %v697 = vld [vmem:[#allocation12 + $0x8] sm:$0xff]
    %v698 = vld [vmem:[#allocation12 + $0x10] sm:$0xff]
    %v699 = vld [vmem:[#allocation12 + $0x18] sm:$0xff]
    %v700 = vsel %vm98, %v613, 0
    %702 = vmatprep.subr.mxu0 0.0
    %703 = vmatpush1.msra.mxu0 %v696
    %704 = vmatprep.subr.mxu0 0.0
    %705 = vmatpush1.msra.mxu0 %v697
    %706 = vmatprep.subr.mxu0 0.0
    %707 = vmatpush1.msra.mxu0 %v698
    %708 = vmatprep.subr.mxu0 0.0
    %709 = vmatpush1.msra.mxu0 %v699
    %710 = vmatprep.subr.mxu0 0.0
    %711 = vmatpush1.msra.mxu0 0.0
    %712 = vmatprep.subr.mxu0 0.0
    %713 = vmatpush1.msra.mxu0 0.0
    %714 = vmatprep.subr.mxu0 0.0
    %715 = vmatpush1.msra.mxu0 0.0
    %716 = vmatprep.subr.mxu0 0.0
    %717 = vmatpush1.msra.mxu0 0.0
    %718 = vmatprep.subr.mxu0 0.0
    %719 = vmatpush1.msra.mxu0 0.0
    %720 = vmatprep.subr.mxu0 0.0
    %721 = vmatpush1.msra.mxu0 0.0
    %722 = vmatprep.subr.mxu0 0.0
    %723 = vmatpush1.msra.mxu0 0.0
    %724 = vmatprep.subr.mxu0 0.0
    %725 = vmatpush1.msra.mxu0 0.0
    %726 = vmatprep.subr.mxu0 0.0
    %727 = vmatpush1.msra.mxu0 0.0
    %728 = vmatprep.subr.mxu0 0.0
    %729 = vmatpush1.msra.mxu0 0.0
    %730 = vmatprep.subr.mxu0 0.0
    %731 = vmatpush1.msra.mxu0 0.0
    %732 = vmatprep.subr.mxu0 0.0
    %733 = vmatpush1.msra.mxu0 0.0
    %734 = vmatprep.subr.mxu0 0.0
    %735 = vmatpush1.msra.mxu0 0.0
    %736 = vmatprep.subr.mxu0 0.0
    %737 = vmatpush1.msra.mxu0 0.0
    %738 = vmatprep.subr.mxu0 0.0
    %739 = vmatpush1.msra.mxu0 0.0
    %740 = vmatprep.subr.mxu0 0.0
    %741 = vmatpush1.msra.mxu0 0.0
    %742 = vmatprep.subr.mxu0 0.0
    %743 = vmatpush1.msra.mxu0 0.0
    %744 = vmatprep.subr.mxu0 0.0
    %745 = vmatpush1.msra.mxu0 0.0
    %746 = vmatprep.subr.mxu0 0.0
    %747 = vmatpush1.msra.mxu0 0.0
    %748 = vmatprep.subr.mxu0 0.0
    %749 = vmatpush1.msra.mxu0 0.0
    %750 = vmatprep.subr.mxu0 0.0
    %751 = vmatpush1.msra.mxu0 0.0
    %752 = vmatprep.subr.mxu0 0.0
    %753 = vmatpush1.msra.mxu0 0.0
    %754 = vmatprep.subr.mxu0 0.0
    %755 = vmatpush1.msra.mxu0 0.0
    %756 = vmatprep.subr.mxu0 0.0
    %757 = vmatpush1.msra.mxu0 0.0
    %758 = vmatprep.subr.mxu0 0.0
    %759 = vmatpush1.msra.mxu0 0.0
    %760 = vmatprep.subr.mxu0 0.0
    %761 = vmatpush1.msra.mxu0 0.0
    %762 = vmatprep.subr.mxu0 0.0
    %763 = vmatpush1.msra.mxu0 0.0
    %764 = vmatprep.subr.mxu0 0.0
    %765 = vmatpush1.msra.mxu0 0.0
    %766 = vmatprep.mubr.f32.mxu0 0.0
    %767 = vmatmul.mubr.f32.gmra.mrb[0].mxu0 %v700
    %v768 = vpop.f32.mrb[0].mxu0
    %v769 = vadd.f32 0.0, %v768
    %v770 = vpop.f32.mrb[0].mxu0
    %771 = vdwg.mxu0
    %v772 = vadd.f32 %v695, %v769
    %v773 = vxor.u32 %v694, 2147483648
    %v774 = vmul.f32 %v773, 1.442695
    %v775 = vpow.pop %v774
    %v776 = vadd.f32 %v775, 1.0
    %v777 = vrcp.pop %v776
    %v778 = vmul.f32 1.0, %v777
    %v779 = vtanh.pop %v694
    %v780 = vmul.f32 %v778, %v574
    %782 = vrot.lane.b32.xlu0 %v779, 64
    %v783 = vpop.permute.xlu0 %782
    %v785 = vmul.f32 %v778, %v783
    %787 = vrot.lane.b32.xlu0 %v785, 32
    %v788 = vpop.permute.xlu0 %787
    %v790 = vadd.f32 %v780, %v788
    %v791 = vtanh.pop %v790
    %793 = vrot.lane.b32.xlu0 %v791, 64
    %v794 = vpop.permute.xlu0 %793
    %v796 = vmul.f32 %v778, %v794
    %v797 = vxor.u32 %v772, 2147483648
    %v798 = vmul.f32 %v797, 1.442695
    %v799 = vpow.pop %v798
    %v800 = vadd.f32 %v799, 1.0
    %v801 = vrcp.pop %v800
    %v802 = vmul.f32 1.0, %v801
    %v803 = vtanh.pop %v772
    %v804 = vmul.f32 %v802, %v598
    %806 = vrot.lane.b32.xlu0 %v803, 64
    %v807 = vpop.permute.xlu0 %806
    %v809 = vmul.f32 %v802, %v807
    %811 = vrot.lane.b32.xlu0 %v809, 32
    %v812 = vpop.permute.xlu0 %811
    %v814 = vadd.f32 %v804, %v812
    %v815 = vtanh.pop %v814
    %817 = vrot.lane.b32.xlu0 %v815, 64
    %v818 = vpop.permute.xlu0 %817
    %v820 = vmul.f32 %v802, %v818
    %822 = vrot.lane.b32.xlu0 %v796, 32
    %v823 = vpop.permute.xlu0 %822
    %s825 = scalar_lea.vmem [#allocation4], 4
    %826 = vst.msk [vmem:[%s825] sm:$0x3] %vm393, %v823
    %828 = vrot.lane.b32.xlu0 %v820, 32
    %v829 = vpop.permute.xlu0 %828
    %s831 = scalar_lea.vmem [#allocation5], 10
    %832 = vst.msk [vmem:[%s831] sm:$0x3] %vm393, %v829
    %v833 = vld [vmem:[#allocation2 + $0x6] sm:$0x3]
    %v834 = vld [vmem:[#allocation11] sm:$0xff]
    %v835 = vld [vmem:[#allocation11 + $0x8] sm:$0xff]
    %v836 = vld [vmem:[#allocation11 + $0x10] sm:$0xff]
    %v837 = vld [vmem:[#allocation11 + $0x18] sm:$0xff]
    %v838 = vsel %vm98, %v823, 0
    %840 = vmatprep.subr.mxu0 0.0
    %841 = vmatpush1.msra.mxu0 %v834
    %842 = vmatprep.subr.mxu0 0.0
    %843 = vmatpush1.msra.mxu0 %v835
    %844 = vmatprep.subr.mxu0 0.0
    %845 = vmatpush1.msra.mxu0 %v836
    %846 = vmatprep.subr.mxu0 0.0
    %847 = vmatpush1.msra.mxu0 %v837
    %848 = vmatprep.subr.mxu0 0.0
    %849 = vmatpush1.msra.mxu0 0.0
    %850 = vmatprep.subr.mxu0 0.0
    %851 = vmatpush1.msra.mxu0 0.0
    %852 = vmatprep.subr.mxu0 0.0
    %853 = vmatpush1.msra.mxu0 0.0
    %854 = vmatprep.subr.mxu0 0.0
    %855 = vmatpush1.msra.mxu0 0.0
    %856 = vmatprep.subr.mxu0 0.0
    %857 = vmatpush1.msra.mxu0 0.0
    %858 = vmatprep.subr.mxu0 0.0
    %859 = vmatpush1.msra.mxu0 0.0
    %860 = vmatprep.subr.mxu0 0.0
    %861 = vmatpush1.msra.mxu0 0.0
    %862 = vmatprep.subr.mxu0 0.0
    %863 = vmatpush1.msra.mxu0 0.0
    %864 = vmatprep.subr.mxu0 0.0
    %865 = vmatpush1.msra.mxu0 0.0
    %866 = vmatprep.subr.mxu0 0.0
    %867 = vmatpush1.msra.mxu0 0.0
    %868 = vmatprep.subr.mxu0 0.0
    %869 = vmatpush1.msra.mxu0 0.0
    %870 = vmatprep.subr.mxu0 0.0
    %871 = vmatpush1.msra.mxu0 0.0
    %872 = vmatprep.subr.mxu0 0.0
    %873 = vmatpush1.msra.mxu0 0.0
    %874 = vmatprep.subr.mxu0 0.0
    %875 = vmatpush1.msra.mxu0 0.0
    %876 = vmatprep.subr.mxu0 0.0
    %877 = vmatpush1.msra.mxu0 0.0
    %878 = vmatprep.subr.mxu0 0.0
    %879 = vmatpush1.msra.mxu0 0.0
    %880 = vmatprep.subr.mxu0 0.0
    %881 = vmatpush1.msra.mxu0 0.0
    %882 = vmatprep.subr.mxu0 0.0
    %883 = vmatpush1.msra.mxu0 0.0
    %884 = vmatprep.subr.mxu0 0.0
    %885 = vmatpush1.msra.mxu0 0.0
    %886 = vmatprep.subr.mxu0 0.0
    %887 = vmatpush1.msra.mxu0 0.0
    %888 = vmatprep.subr.mxu0 0.0
    %889 = vmatpush1.msra.mxu0 0.0
    %890 = vmatprep.subr.mxu0 0.0
    %891 = vmatpush1.msra.mxu0 0.0
    %892 = vmatprep.subr.mxu0 0.0
    %893 = vmatpush1.msra.mxu0 0.0
    %894 = vmatprep.subr.mxu0 0.0
    %895 = vmatpush1.msra.mxu0 0.0
    %896 = vmatprep.subr.mxu0 0.0
    %897 = vmatpush1.msra.mxu0 0.0
    %898 = vmatprep.subr.mxu0 0.0
    %899 = vmatpush1.msra.mxu0 0.0
    %900 = vmatprep.subr.mxu0 0.0
    %901 = vmatpush1.msra.mxu0 0.0
    %902 = vmatprep.subr.mxu0 0.0
    %903 = vmatpush1.msra.mxu0 0.0
    %904 = vmatprep.mubr.f32.mxu0 0.0
    %905 = vmatmul.mubr.f32.gmra.mrb[0].mxu0 %v838
    %v906 = vpop.f32.mrb[0].mxu0
    %v907 = vadd.f32 0.0, %v906
    %v908 = vpop.f32.mrb[0].mxu0
    %909 = vdwg.mxu0
    %v910 = vadd.f32 %v833, %v907
    %v911 = vld [vmem:[#allocation3 + $0x8] sm:$0x3]
    %v912 = vld [vmem:[#allocation12] sm:$0xff]
    %v913 = vld [vmem:[#allocation12 + $0x8] sm:$0xff]
    %v914 = vld [vmem:[#allocation12 + $0x10] sm:$0xff]
    %v915 = vld [vmem:[#allocation12 + $0x18] sm:$0xff]
    %v916 = vsel %vm98, %v829, 0
    %918 = vmatprep.subr.mxu0 0.0
    %919 = vmatpush1.msra.mxu0 %v912
    %920 = vmatprep.subr.mxu0 0.0
    %921 = vmatpush1.msra.mxu0 %v913
    %922 = vmatprep.subr.mxu0 0.0
    %923 = vmatpush1.msra.mxu0 %v914
    %924 = vmatprep.subr.mxu0 0.0
    %925 = vmatpush1.msra.mxu0 %v915
    %926 = vmatprep.subr.mxu0 0.0
    %927 = vmatpush1.msra.mxu0 0.0
    %928 = vmatprep.subr.mxu0 0.0
    %929 = vmatpush1.msra.mxu0 0.0
    %930 = vmatprep.subr.mxu0 0.0
    %931 = vmatpush1.msra.mxu0 0.0
    %932 = vmatprep.subr.mxu0 0.0
    %933 = vmatpush1.msra.mxu0 0.0
    %934 = vmatprep.subr.mxu0 0.0
    %935 = vmatpush1.msra.mxu0 0.0
    %936 = vmatprep.subr.mxu0 0.0
    %937 = vmatpush1.msra.mxu0 0.0
    %938 = vmatprep.subr.mxu0 0.0
    %939 = vmatpush1.msra.mxu0 0.0
    %940 = vmatprep.subr.mxu0 0.0
    %941 = vmatpush1.msra.mxu0 0.0
    %942 = vmatprep.subr.mxu0 0.0
    %943 = vmatpush1.msra.mxu0 0.0
    %944 = vmatprep.subr.mxu0 0.0
    %945 = vmatpush1.msra.mxu0 0.0
    %946 = vmatprep.subr.mxu0 0.0
    %947 = vmatpush1.msra.mxu0 0.0
    %948 = vmatprep.subr.mxu0 0.0
    %949 = vmatpush1.msra.mxu0 0.0
    %950 = vmatprep.subr.mxu0 0.0
    %951 = vmatpush1.msra.mxu0 0.0
    %952 = vmatprep.subr.mxu0 0.0
    %953 = vmatpush1.msra.mxu0 0.0
    %954 = vmatprep.subr.mxu0 0.0
    %955 = vmatpush1.msra.mxu0 0.0
    %956 = vmatprep.subr.mxu0 0.0
    %957 = vmatpush1.msra.mxu0 0.0
    %958 = vmatprep.subr.mxu0 0.0
    %959 = vmatpush1.msra.mxu0 0.0
    %960 = vmatprep.subr.mxu0 0.0
    %961 = vmatpush1.msra.mxu0 0.0
    %962 = vmatprep.subr.mxu0 0.0
    %963 = vmatpush1.msra.mxu0 0.0
    %964 = vmatprep.subr.mxu0 0.0
    %965 = vmatpush1.msra.mxu0 0.0
    %966 = vmatprep.subr.mxu0 0.0
    %967 = vmatpush1.msra.mxu0 0.0
    %968 = vmatprep.subr.mxu0 0.0
    %969 = vmatpush1.msra.mxu0 0.0
    %970 = vmatprep.subr.mxu0 0.0
    %971 = vmatpush1.msra.mxu0 0.0
    %972 = vmatprep.subr.mxu0 0.0
    %973 = vmatpush1.msra.mxu0 0.0
    %974 = vmatprep.subr.mxu0 0.0
    %975 = vmatpush1.msra.mxu0 0.0
    %976 = vmatprep.subr.mxu0 0.0
    %977 = vmatpush1.msra.mxu0 0.0
    %978 = vmatprep.subr.mxu0 0.0
    %979 = vmatpush1.msra.mxu0 0.0
    %980 = vmatprep.subr.mxu0 0.0
    %981 = vmatpush1.msra.mxu0 0.0
    %982 = vmatprep.mubr.f32.mxu0 0.0
    %983 = vmatmul.mubr.f32.gmra.mrb[0].mxu0 %v916
    %v984 = vpop.f32.mrb[0].mxu0
    %v985 = vadd.f32 0.0, %v984
    %v986 = vpop.f32.mrb[0].mxu0
    %987 = vdwg.mxu0
    %v988 = vadd.f32 %v911, %v985
    %v989 = vxor.u32 %v910, 2147483648
    %v990 = vmul.f32 %v989, 1.442695
    %v991 = vpow.pop %v990
    %v992 = vadd.f32 %v991, 1.0
    %v993 = vrcp.pop %v992
    %v994 = vmul.f32 1.0, %v993
    %v995 = vtanh.pop %v910
    %v996 = vmul.f32 %v994, %v790
    %998 = vrot.lane.b32.xlu0 %v995, 64
    %v999 = vpop.permute.xlu0 %998
    %v1001 = vmul.f32 %v994, %v999
    %1003 = vrot.lane.b32.xlu0 %v1001, 32
    %v1004 = vpop.permute.xlu0 %1003
    %v1006 = vadd.f32 %v996, %v1004
    %v1007 = vtanh.pop %v1006
    %1009 = vrot.lane.b32.xlu0 %v1007, 64
    %v1010 = vpop.permute.xlu0 %1009
    %v1012 = vmul.f32 %v994, %v1010
    %v1013 = vxor.u32 %v988, 2147483648
    %v1014 = vmul.f32 %v1013, 1.442695
    %v1015 = vpow.pop %v1014
    %v1016 = vadd.f32 %v1015, 1.0
    %v1017 = vrcp.pop %v1016
    %v1018 = vmul.f32 1.0, %v1017
    %v1019 = vtanh.pop %v988
    %v1020 = vmul.f32 %v1018, %v814
    %1022 = vrot.lane.b32.xlu0 %v1019, 64
    %v1023 = vpop.permute.xlu0 %1022
    %v1025 = vmul.f32 %v1018, %v1023
    %1027 = vrot.lane.b32.xlu0 %v1025, 32
    %v1028 = vpop.permute.xlu0 %1027
    %v1030 = vadd.f32 %v1020, %v1028
    %v1031 = vtanh.pop %v1030
    %1033 = vrot.lane.b32.xlu0 %v1031, 64
    %v1034 = vpop.permute.xlu0 %1033
    %v1036 = vmul.f32 %v1018, %v1034
    %1038 = vrot.lane.b32.xlu0 %v1012, 32
    %v1039 = vpop.permute.xlu0 %1038
    %s1041 = scalar_lea.vmem [#allocation4], 6
    %1042 = vst.msk [vmem:[%s1041] sm:$0x3] %vm393, %v1039
    %1044 = vrot.lane.b32.xlu0 %v1036, 32
    %v1045 = vpop.permute.xlu0 %1044
    %s1047 = scalar_lea.vmem [#allocation5], 8
    %1048 = vst.msk [vmem:[%s1047] sm:$0x3] %vm393, %v1045
    %v1049 = vld [vmem:[#allocation2 + $0x8] sm:$0x3]
    %v1050 = vld [vmem:[#allocation11] sm:$0xff]
    %v1051 = vld [vmem:[#allocation11 + $0x8] sm:$0xff]
    %v1052 = vld [vmem:[#allocation11 + $0x10] sm:$0xff]
    %v1053 = vld [vmem:[#allocation11 + $0x18] sm:$0xff]
    %v1054 = vsel %vm98, %v1039, 0
    %1056 = vmatprep.subr.mxu0 0.0
    %1057 = vmatpush1.msra.mxu0 %v1050
    %1058 = vmatprep.subr.mxu0 0.0
    %1059 = vmatpush1.msra.mxu0 %v1051
    %1060 = vmatprep.subr.mxu0 0.0
    %1061 = vmatpush1.msra.mxu0 %v1052
    %1062 = vmatprep.subr.mxu0 0.0
    %1063 = vmatpush1.msra.mxu0 %v1053
    %1064 = vmatprep.subr.mxu0 0.0
    %1065 = vmatpush1.msra.mxu0 0.0
    %1066 = vmatprep.subr.mxu0 0.0
    %1067 = vmatpush1.msra.mxu0 0.0
    %1068 = vmatprep.subr.mxu0 0.0
    %1069 = vmatpush1.msra.mxu0 0.0
    %1070 = vmatprep.subr.mxu0 0.0
    %1071 = vmatpush1.msra.mxu0 0.0
    %1072 = vmatprep.subr.mxu0 0.0
    %1073 = vmatpush1.msra.mxu0 0.0
    %1074 = vmatprep.subr.mxu0 0.0
    %1075 = vmatpush1.msra.mxu0 0.0
    %1076 = vmatprep.subr.mxu0 0.0
    %1077 = vmatpush1.msra.mxu0 0.0
    %1078 = vmatprep.subr.mxu0 0.0
    %1079 = vmatpush1.msra.mxu0 0.0
    %1080 = vmatprep.subr.mxu0 0.0
    %1081 = vmatpush1.msra.mxu0 0.0
    %1082 = vmatprep.subr.mxu0 0.0
    %1083 = vmatpush1.msra.mxu0 0.0
    %1084 = vmatprep.subr.mxu0 0.0
    %1085 = vmatpush1.msra.mxu0 0.0
    %1086 = vmatprep.subr.mxu0 0.0
    %1087 = vmatpush1.msra.mxu0 0.0
    %1088 = vmatprep.subr.mxu0 0.0
    %1089 = vmatpush1.msra.mxu0 0.0
    %1090 = vmatprep.subr.mxu0 0.0
    %1091 = vmatpush1.msra.mxu0 0.0
    %1092 = vmatprep.subr.mxu0 0.0
    %1093 = vmatpush1.msra.mxu0 0.0
    %1094 = vmatprep.subr.mxu0 0.0
    %1095 = vmatpush1.msra.mxu0 0.0
    %1096 = vmatprep.subr.mxu0 0.0
    %1097 = vmatpush1.msra.mxu0 0.0
    %1098 = vmatprep.subr.mxu0 0.0
    %1099 = vmatpush1.msra.mxu0 0.0
    %1100 = vmatprep.subr.mxu0 0.0
    %1101 = vmatpush1.msra.mxu0 0.0
    %1102 = vmatprep.subr.mxu0 0.0
    %1103 = vmatpush1.msra.mxu0 0.0
    %1104 = vmatprep.subr.mxu0 0.0
    %1105 = vmatpush1.msra.mxu0 0.0
    %1106 = vmatprep.subr.mxu0 0.0
    %1107 = vmatpush1.msra.mxu0 0.0
    %1108 = vmatprep.subr.mxu0 0.0
    %1109 = vmatpush1.msra.mxu0 0.0
    %1110 = vmatprep.subr.mxu0 0.0
    %1111 = vmatpush1.msra.mxu0 0.0
    %1112 = vmatprep.subr.mxu0 0.0
    %1113 = vmatpush1.msra.mxu0 0.0
    %1114 = vmatprep.subr.mxu0 0.0
    %1115 = vmatpush1.msra.mxu0 0.0
    %1116 = vmatprep.subr.mxu0 0.0
    %1117 = vmatpush1.msra.mxu0 0.0
    %1118 = vmatprep.subr.mxu0 0.0
    %1119 = vmatpush1.msra.mxu0 0.0
    %1120 = vmatprep.mubr.f32.mxu0 0.0
    %1121 = vmatmul.mubr.f32.gmra.mrb[0].mxu0 %v1054
    %v1122 = vpop.f32.mrb[0].mxu0
    %v1123 = vadd.f32 0.0, %v1122
    %v1124 = vpop.f32.mrb[0].mxu0
    %1125 = vdwg.mxu0
    %v1126 = vadd.f32 %v1049, %v1123
    %v1127 = vld [vmem:[#allocation3 + $0x6] sm:$0x3]
    %v1128 = vld [vmem:[#allocation12] sm:$0xff]
    %v1129 = vld [vmem:[#allocation12 + $0x8] sm:$0xff]
    %v1130 = vld [vmem:[#allocation12 + $0x10] sm:$0xff]
    %v1131 = vld [vmem:[#allocation12 + $0x18] sm:$0xff]
    %v1132 = vsel %vm98, %v1045, 0
    %1134 = vmatprep.subr.mxu0 0.0
    %1135 = vmatpush1.msra.mxu0 %v1128
    %1136 = vmatprep.subr.mxu0 0.0
    %1137 = vmatpush1.msra.mxu0 %v1129
    %1138 = vmatprep.subr.mxu0 0.0
    %1139 = vmatpush1.msra.mxu0 %v1130
    %1140 = vmatprep.subr.mxu0 0.0
    %1141 = vmatpush1.msra.mxu0 %v1131
    %1142 = vmatprep.subr.mxu0 0.0
    %1143 = vmatpush1.msra.mxu0 0.0
    %1144 = vmatprep.subr.mxu0 0.0
    %1145 = vmatpush1.msra.mxu0 0.0
    %1146 = vmatprep.subr.mxu0 0.0
    %1147 = vmatpush1.msra.mxu0 0.0
    %1148 = vmatprep.subr.mxu0 0.0
    %1149 = vmatpush1.msra.mxu0 0.0
    %1150 = vmatprep.subr.mxu0 0.0
    %1151 = vmatpush1.msra.mxu0 0.0
    %1152 = vmatprep.subr.mxu0 0.0
    %1153 = vmatpush1.msra.mxu0 0.0
    %1154 = vmatprep.subr.mxu0 0.0
    %1155 = vmatpush1.msra.mxu0 0.0
    %1156 = vmatprep.subr.mxu0 0.0
    %1157 = vmatpush1.msra.mxu0 0.0
    %1158 = vmatprep.subr.mxu0 0.0
    %1159 = vmatpush1.msra.mxu0 0.0
    %1160 = vmatprep.subr.mxu0 0.0
    %1161 = vmatpush1.msra.mxu0 0.0
    %1162 = vmatprep.subr.mxu0 0.0
    %1163 = vmatpush1.msra.mxu0 0.0
    %1164 = vmatprep.subr.mxu0 0.0
    %1165 = vmatpush1.msra.mxu0 0.0
    %1166 = vmatprep.subr.mxu0 0.0
    %1167 = vmatpush1.msra.mxu0 0.0
    %1168 = vmatprep.subr.mxu0 0.0
    %1169 = vmatpush1.msra.mxu0 0.0
    %1170 = vmatprep.subr.mxu0 0.0
    %1171 = vmatpush1.msra.mxu0 0.0
    %1172 = vmatprep.subr.mxu0 0.0
    %1173 = vmatpush1.msra.mxu0 0.0
    %1174 = vmatprep.subr.mxu0 0.0
    %1175 = vmatpush1.msra.mxu0 0.0
    %1176 = vmatprep.subr.mxu0 0.0
    %1177 = vmatpush1.msra.mxu0 0.0
    %1178 = vmatprep.subr.mxu0 0.0
    %1179 = vmatpush1.msra.mxu0 0.0
    %1180 = vmatprep.subr.mxu0 0.0
    %1181 = vmatpush1.msra.mxu0 0.0
    %1182 = vmatprep.subr.mxu0 0.0
    %1183 = vmatpush1.msra.mxu0 0.0
    %1184 = vmatprep.subr.mxu0 0.0
    %1185 = vmatpush1.msra.mxu0 0.0
    %1186 = vmatprep.subr.mxu0 0.0
    %1187 = vmatpush1.msra.mxu0 0.0
    %1188 = vmatprep.subr.mxu0 0.0
    %1189 = vmatpush1.msra.mxu0 0.0
    %1190 = vmatprep.subr.mxu0 0.0
    %1191 = vmatpush1.msra.mxu0 0.0
    %1192 = vmatprep.subr.mxu0 0.0
    %1193 = vmatpush1.msra.mxu0 0.0
    %1194 = vmatprep.subr.mxu0 0.0
    %1195 = vmatpush1.msra.mxu0 0.0
    %1196 = vmatprep.subr.mxu0 0.0
    %1197 = vmatpush1.msra.mxu0 0.0
    %1198 = vmatprep.mubr.f32.mxu0 0.0
    %1199 = vmatmul.mubr.f32.gmra.mrb[0].mxu0 %v1132
    %v1200 = vpop.f32.mrb[0].mxu0
    %v1201 = vadd.f32 0.0, %v1200
    %v1202 = vpop.f32.mrb[0].mxu0
    %1203 = vdwg.mxu0
    %v1204 = vadd.f32 %v1127, %v1201
    %v1205 = vxor.u32 %v1126, 2147483648
    %v1206 = vmul.f32 %v1205, 1.442695
    %v1207 = vpow.pop %v1206
    %v1208 = vadd.f32 %v1207, 1.0
    %v1209 = vrcp.pop %v1208
    %v1210 = vmul.f32 1.0, %v1209
    %v1211 = vtanh.pop %v1126
    %v1212 = vmul.f32 %v1210, %v1006
    %1214 = vrot.lane.b32.xlu0 %v1211, 64
    %v1215 = vpop.permute.xlu0 %1214
    %v1217 = vmul.f32 %v1210, %v1215
    %1219 = vrot.lane.b32.xlu0 %v1217, 32
    %v1220 = vpop.permute.xlu0 %1219
    %v1222 = vadd.f32 %v1212, %v1220
    %v1223 = vtanh.pop %v1222
    %1225 = vrot.lane.b32.xlu0 %v1223, 64
    %v1226 = vpop.permute.xlu0 %1225
    %v1228 = vmul.f32 %v1210, %v1226
    %v1229 = vxor.u32 %v1204, 2147483648
    %v1230 = vmul.f32 %v1229, 1.442695
    %v1231 = vpow.pop %v1230
    %v1232 = vadd.f32 %v1231, 1.0
    %v1233 = vrcp.pop %v1232
    %v1234 = vmul.f32 1.0, %v1233
    %v1235 = vtanh.pop %v1204
    %v1236 = vmul.f32 %v1234, %v1030
    %1238 = vrot.lane.b32.xlu0 %v1235, 64
    %v1239 = vpop.permute.xlu0 %1238
    %v1241 = vmul.f32 %v1234, %v1239
    %1243 = vrot.lane.b32.xlu0 %v1241, 32
    %v1244 = vpop.permute.xlu0 %1243
    %v1246 = vadd.f32 %v1236, %v1244
    %v1247 = vtanh.pop %v1246
    %1249 = vrot.lane.b32.xlu0 %v1247, 64
    %v1250 = vpop.permute.xlu0 %1249
    %v1252 = vmul.f32 %v1234, %v1250
    %1254 = vrot.lane.b32.xlu0 %v1228, 32
    %v1255 = vpop.permute.xlu0 %1254
    %s1257 = scalar_lea.vmem [#allocation4], 8
    %1258 = vst.msk [vmem:[%s1257] sm:$0x3] %vm393, %v1255
    %1260 = vrot.lane.b32.xlu0 %v1252, 32
    %v1261 = vpop.permute.xlu0 %1260
    %s1263 = scalar_lea.vmem [#allocation5], 6
    %1264 = vst.msk [vmem:[%s1263] sm:$0x3] %vm393, %v1261
    %v1265 = vld [vmem:[#allocation2 + $0xa] sm:$0x3]
    %v1266 = vld [vmem:[#allocation11] sm:$0xff]
    %v1267 = vld [vmem:[#allocation11 + $0x8] sm:$0xff]
    %v1268 = vld [vmem:[#allocation11 + $0x10] sm:$0xff]
    %v1269 = vld [vmem:[#allocation11 + $0x18] sm:$0xff]
    %v1270 = vsel %vm98, %v1255, 0
    %1272 = vmatprep.subr.mxu0 0.0
    %1273 = vmatpush1.msra.mxu0 %v1266
    %1274 = vmatprep.subr.mxu0 0.0
    %1275 = vmatpush1.msra.mxu0 %v1267
    %1276 = vmatprep.subr.mxu0 0.0
    %1277 = vmatpush1.msra.mxu0 %v1268
    %1278 = vmatprep.subr.mxu0 0.0
    %1279 = vmatpush1.msra.mxu0 %v1269
    %1280 = vmatprep.subr.mxu0 0.0
    %1281 = vmatpush1.msra.mxu0 0.0
    %1282 = vmatprep.subr.mxu0 0.0
    %1283 = vmatpush1.msra.mxu0 0.0
    %1284 = vmatprep.subr.mxu0 0.0
    %1285 = vmatpush1.msra.mxu0 0.0
    %1286 = vmatprep.subr.mxu0 0.0
    %1287 = vmatpush1.msra.mxu0 0.0
    %1288 = vmatprep.subr.mxu0 0.0
    %1289 = vmatpush1.msra.mxu0 0.0
    %1290 = vmatprep.subr.mxu0 0.0
    %1291 = vmatpush1.msra.mxu0 0.0
    %1292 = vmatprep.subr.mxu0 0.0
    %1293 = vmatpush1.msra.mxu0 0.0
    %1294 = vmatprep.subr.mxu0 0.0
    %1295 = vmatpush1.msra.mxu0 0.0
    %1296 = vmatprep.subr.mxu0 0.0
    %1297 = vmatpush1.msra.mxu0 0.0
    %1298 = vmatprep.subr.mxu0 0.0
    %1299 = vmatpush1.msra.mxu0 0.0
    %1300 = vmatprep.subr.mxu0 0.0
    %1301 = vmatpush1.msra.mxu0 0.0
    %1302 = vmatprep.subr.mxu0 0.0
    %1303 = vmatpush1.msra.mxu0 0.0
    %1304 = vmatprep.subr.mxu0 0.0
    %1305 = vmatpush1.msra.mxu0 0.0
    %1306 = vmatprep.subr.mxu0 0.0
    %1307 = vmatpush1.msra.mxu0 0.0
    %1308 = vmatprep.subr.mxu0 0.0
    %1309 = vmatpush1.msra.mxu0 0.0
    %1310 = vmatprep.subr.mxu0 0.0
    %1311 = vmatpush1.msra.mxu0 0.0
    %1312 = vmatprep.subr.mxu0 0.0
    %1313 = vmatpush1.msra.mxu0 0.0
    %1314 = vmatprep.subr.mxu0 0.0
    %1315 = vmatpush1.msra.mxu0 0.0
    %1316 = vmatprep.subr.mxu0 0.0
    %1317 = vmatpush1.msra.mxu0 0.0
    %1318 = vmatprep.subr.mxu0 0.0
    %1319 = vmatpush1.msra.mxu0 0.0
    %1320 = vmatprep.subr.mxu0 0.0
    %1321 = vmatpush1.msra.mxu0 0.0
    %1322 = vmatprep.subr.mxu0 0.0
    %1323 = vmatpush1.msra.mxu0 0.0
    %1324 = vmatprep.subr.mxu0 0.0
    %1325 = vmatpush1.msra.mxu0 0.0
    %1326 = vmatprep.subr.mxu0 0.0
    %1327 = vmatpush1.msra.mxu0 0.0
    %1328 = vmatprep.subr.mxu0 0.0
    %1329 = vmatpush1.msra.mxu0 0.0
    %1330 = vmatprep.subr.mxu0 0.0
    %1331 = vmatpush1.msra.mxu0 0.0
    %1332 = vmatprep.subr.mxu0 0.0
    %1333 = vmatpush1.msra.mxu0 0.0
    %1334 = vmatprep.subr.mxu0 0.0
    %1335 = vmatpush1.msra.mxu0 0.0
    %1336 = vmatprep.mubr.f32.mxu0 0.0
    %1337 = vmatmul.mubr.f32.gmra.mrb[0].mxu0 %v1270
    %v1338 = vpop.f32.mrb[0].mxu0
    %v1339 = vadd.f32 0.0, %v1338
    %v1340 = vpop.f32.mrb[0].mxu0
    %1341 = vdwg.mxu0
    %v1342 = vadd.f32 %v1265, %v1339
    %v1343 = vld [vmem:[#allocation3 + $0x4] sm:$0x3]
    %v1344 = vld [vmem:[#allocation12] sm:$0xff]
    %v1345 = vld [vmem:[#allocation12 + $0x8] sm:$0xff]
    %v1346 = vld [vmem:[#allocation12 + $0x10] sm:$0xff]
    %v1347 = vld [vmem:[#allocation12 + $0x18] sm:$0xff]
    %v1348 = vsel %vm98, %v1261, 0
    %1350 = vmatprep.subr.mxu0 0.0
    %1351 = vmatpush1.msra.mxu0 %v1344
    %1352 = vmatprep.subr.mxu0 0.0
    %1353 = vmatpush1.msra.mxu0 %v1345
    %1354 = vmatprep.subr.mxu0 0.0
    %1355 = vmatpush1.msra.mxu0 %v1346
    %1356 = vmatprep.subr.mxu0 0.0
    %1357 = vmatpush1.msra.mxu0 %v1347
    %1358 = vmatprep.subr.mxu0 0.0
    %1359 = vmatpush1.msra.mxu0 0.0
    %1360 = vmatprep.subr.mxu0 0.0
    %1361 = vmatpush1.msra.mxu0 0.0
    %1362 = vmatprep.subr.mxu0 0.0
    %1363 = vmatpush1.msra.mxu0 0.0
    %1364 = vmatprep.subr.mxu0 0.0
    %1365 = vmatpush1.msra.mxu0 0.0
    %1366 = vmatprep.subr.mxu0 0.0
    %1367 = vmatpush1.msra.mxu0 0.0
    %1368 = vmatprep.subr.mxu0 0.0
    %1369 = vmatpush1.msra.mxu0 0.0
    %1370 = vmatprep.subr.mxu0 0.0
    %1371 = vmatpush1.msra.mxu0 0.0
    %1372 = vmatprep.subr.mxu0 0.0
    %1373 = vmatpush1.msra.mxu0 0.0
    %1374 = vmatprep.subr.mxu0 0.0
    %1375 = vmatpush1.msra.mxu0 0.0
    %1376 = vmatprep.subr.mxu0 0.0
    %1377 = vmatpush1.msra.mxu0 0.0
    %1378 = vmatprep.subr.mxu0 0.0
    %1379 = vmatpush1.msra.mxu0 0.0
    %1380 = vmatprep.subr.mxu0 0.0
    %1381 = vmatpush1.msra.mxu0 0.0
    %1382 = vmatprep.subr.mxu0 0.0
    %1383 = vmatpush1.msra.mxu0 0.0
    %1384 = vmatprep.subr.mxu0 0.0
    %1385 = vmatpush1.msra.mxu0 0.0
    %1386 = vmatprep.subr.mxu0 0.0
    %1387 = vmatpush1.msra.mxu0 0.0
    %1388 = vmatprep.subr.mxu0 0.0
    %1389 = vmatpush1.msra.mxu0 0.0
    %1390 = vmatprep.subr.mxu0 0.0
    %1391 = vmatpush1.msra.mxu0 0.0
    %1392 = vmatprep.subr.mxu0 0.0
    %1393 = vmatpush1.msra.mxu0 0.0
    %1394 = vmatprep.subr.mxu0 0.0
    %1395 = vmatpush1.msra.mxu0 0.0
    %1396 = vmatprep.subr.mxu0 0.0
    %1397 = vmatpush1.msra.mxu0 0.0
    %1398 = vmatprep.subr.mxu0 0.0
    %1399 = vmatpush1.msra.mxu0 0.0
    %1400 = vmatprep.subr.mxu0 0.0
    %1401 = vmatpush1.msra.mxu0 0.0
    %1402 = vmatprep.subr.mxu0 0.0
    %1403 = vmatpush1.msra.mxu0 0.0
    %1404 = vmatprep.subr.mxu0 0.0
    %1405 = vmatpush1.msra.mxu0 0.0
    %1406 = vmatprep.subr.mxu0 0.0
    %1407 = vmatpush1.msra.mxu0 0.0
    %1408 = vmatprep.subr.mxu0 0.0
    %1409 = vmatpush1.msra.mxu0 0.0
    %1410 = vmatprep.subr.mxu0 0.0
    %1411 = vmatpush1.msra.mxu0 0.0
    %1412 = vmatprep.subr.mxu0 0.0
    %1413 = vmatpush1.msra.mxu0 0.0
    %1414 = vmatprep.mubr.f32.mxu0 0.0
    %1415 = vmatmul.mubr.f32.gmra.mrb[0].mxu0 %v1348
    %v1416 = vpop.f32.mrb[0].mxu0
    %v1417 = vadd.f32 0.0, %v1416
    %v1418 = vpop.f32.mrb[0].mxu0
    %1419 = vdwg.mxu0
    %v1420 = vadd.f32 %v1343, %v1417
    %v1421 = vxor.u32 %v1342, 2147483648
    %v1422 = vmul.f32 %v1421, 1.442695
    %v1423 = vpow.pop %v1422
    %v1424 = vadd.f32 %v1423, 1.0
    %v1425 = vrcp.pop %v1424
    %v1426 = vmul.f32 1.0, %v1425
    %v1427 = vtanh.pop %v1342
    %v1428 = vmul.f32 %v1426, %v1222
    %1430 = vrot.lane.b32.xlu0 %v1427, 64
    %v1431 = vpop.permute.xlu0 %1430
    %v1433 = vmul.f32 %v1426, %v1431
    %1435 = vrot.lane.b32.xlu0 %v1433, 32
    %v1436 = vpop.permute.xlu0 %1435
    %v1438 = vadd.f32 %v1428, %v1436
    %v1439 = vtanh.pop %v1438
    %1441 = vrot.lane.b32.xlu0 %v1439, 64
    %v1442 = vpop.permute.xlu0 %1441
    %v1444 = vmul.f32 %v1426, %v1442
    %v1445 = vxor.u32 %v1420, 2147483648
    %v1446 = vmul.f32 %v1445, 1.442695
    %v1447 = vpow.pop %v1446
    %v1448 = vadd.f32 %v1447, 1.0
    %v1449 = vrcp.pop %v1448
    %v1450 = vmul.f32 1.0, %v1449
    %v1451 = vtanh.pop %v1420
    %v1452 = vmul.f32 %v1450, %v1246
    %1454 = vrot.lane.b32.xlu0 %v1451, 64
    %v1455 = vpop.permute.xlu0 %1454
    %v1457 = vmul.f32 %v1450, %v1455
    %1459 = vrot.lane.b32.xlu0 %v1457, 32
    %v1460 = vpop.permute.xlu0 %1459
    %v1462 = vadd.f32 %v1452, %v1460
    %v1463 = vtanh.pop %v1462
    %1465 = vrot.lane.b32.xlu0 %v1463, 64
    %v1466 = vpop.permute.xlu0 %1465
    %v1468 = vmul.f32 %v1450, %v1466
    %1470 = vrot.lane.b32.xlu0 %v1444, 32
    %v1471 = vpop.permute.xlu0 %1470
    %s1473 = scalar_lea.vmem [#allocation4], 10
    %1474 = vst.msk [vmem:[%s1473] sm:$0x3] %vm393, %v1471
    %1476 = vrot.lane.b32.xlu0 %v1468, 32
    %v1477 = vpop.permute.xlu0 %1476
    %s1479 = scalar_lea.vmem [#allocation5], 4
    %1480 = vst.msk [vmem:[%s1479] sm:$0x3] %vm393, %v1477
    %v1481 = vld [vmem:[#allocation2 + $0xc] sm:$0x3]
    %v1482 = vld [vmem:[#allocation11] sm:$0xff]
    %v1483 = vld [vmem:[#allocation11 + $0x8] sm:$0xff]
    %v1484 = vld [vmem:[#allocation11 + $0x10] sm:$0xff]
    %v1485 = vld [vmem:[#allocation11 + $0x18] sm:$0xff]
    %v1486 = vsel %vm98, %v1471, 0
    %1488 = vmatprep.subr.mxu0 0.0
    %1489 = vmatpush1.msra.mxu0 %v1482
    %1490 = vmatprep.subr.mxu0 0.0
    %1491 = vmatpush1.msra.mxu0 %v1483
    %1492 = vmatprep.subr.mxu0 0.0
    %1493 = vmatpush1.msra.mxu0 %v1484
    %1494 = vmatprep.subr.mxu0 0.0
    %1495 = vmatpush1.msra.mxu0 %v1485
    %1496 = vmatprep.subr.mxu0 0.0
    %1497 = vmatpush1.msra.mxu0 0.0
    %1498 = vmatprep.subr.mxu0 0.0
    %1499 = vmatpush1.msra.mxu0 0.0
    %1500 = vmatprep.subr.mxu0 0.0
    %1501 = vmatpush1.msra.mxu0 0.0
    %1502 = vmatprep.subr.mxu0 0.0
    %1503 = vmatpush1.msra.mxu0 0.0
    %1504 = vmatprep.subr.mxu0 0.0
    %1505 = vmatpush1.msra.mxu0 0.0
    %1506 = vmatprep.subr.mxu0 0.0
    %1507 = vmatpush1.msra.mxu0 0.0
    %1508 = vmatprep.subr.mxu0 0.0
    %1509 = vmatpush1.msra.mxu0 0.0
    %1510 = vmatprep.subr.mxu0 0.0
    %1511 = vmatpush1.msra.mxu0 0.0
    %1512 = vmatprep.subr.mxu0 0.0
    %1513 = vmatpush1.msra.mxu0 0.0
    %1514 = vmatprep.subr.mxu0 0.0
    %1515 = vmatpush1.msra.mxu0 0.0
    %1516 = vmatprep.subr.mxu0 0.0
    %1517 = vmatpush1.msra.mxu0 0.0
    %1518 = vmatprep.subr.mxu0 0.0
    %1519 = vmatpush1.msra.mxu0 0.0
    %1520 = vmatprep.subr.mxu0 0.0
    %1521 = vmatpush1.msra.mxu0 0.0
    %1522 = vmatprep.subr.mxu0 0.0
    %1523 = vmatpush1.msra.mxu0 0.0
    %1524 = vmatprep.subr.mxu0 0.0
    %1525 = vmatpush1.msra.mxu0 0.0
    %1526 = vmatprep.subr.mxu0 0.0
    %1527 = vmatpush1.msra.mxu0 0.0
    %1528 = vmatprep.subr.mxu0 0.0
    %1529 = vmatpush1.msra.mxu0 0.0
    %1530 = vmatprep.subr.mxu0 0.0
    %1531 = vmatpush1.msra.mxu0 0.0
    %1532 = vmatprep.subr.mxu0 0.0
    %1533 = vmatpush1.msra.mxu0 0.0
    %1534 = vmatprep.subr.mxu0 0.0
    %1535 = vmatpush1.msra.mxu0 0.0
    %1536 = vmatprep.subr.mxu0 0.0
    %1537 = vmatpush1.msra.mxu0 0.0
    %1538 = vmatprep.subr.mxu0 0.0
    %1539 = vmatpush1.msra.mxu0 0.0
    %1540 = vmatprep.subr.mxu0 0.0
    %1541 = vmatpush1.msra.mxu0 0.0
    %1542 = vmatprep.subr.mxu0 0.0
    %1543 = vmatpush1.msra.mxu0 0.0
    %1544 = vmatprep.subr.mxu0 0.0
    %1545 = vmatpush1.msra.mxu0 0.0
    %1546 = vmatprep.subr.mxu0 0.0
    %1547 = vmatpush1.msra.mxu0 0.0
    %1548 = vmatprep.subr.mxu0 0.0
    %1549 = vmatpush1.msra.mxu0 0.0
    %1550 = vmatprep.subr.mxu0 0.0
    %1551 = vmatpush1.msra.mxu0 0.0
    %1552 = vmatprep.mubr.f32.mxu0 0.0
    %1553 = vmatmul.mubr.f32.gmra.mrb[0].mxu0 %v1486
    %v1554 = vpop.f32.mrb[0].mxu0
    %v1555 = vadd.f32 0.0, %v1554
    %v1556 = vpop.f32.mrb[0].mxu0
    %1557 = vdwg.mxu0
    %v1558 = vadd.f32 %v1481, %v1555
    %v1559 = vld [vmem:[#allocation3 + $0x2] sm:$0x3]
    %v1560 = vld [vmem:[#allocation12] sm:$0xff]
    %v1561 = vld [vmem:[#allocation12 + $0x8] sm:$0xff]
    %v1562 = vld [vmem:[#allocation12 + $0x10] sm:$0xff]
    %v1563 = vld [vmem:[#allocation12 + $0x18] sm:$0xff]
    %v1564 = vsel %vm98, %v1477, 0
    %1566 = vmatprep.subr.mxu0 0.0
    %1567 = vmatpush1.msra.mxu0 %v1560
    %1568 = vmatprep.subr.mxu0 0.0
    %1569 = vmatpush1.msra.mxu0 %v1561
    %1570 = vmatprep.subr.mxu0 0.0
    %1571 = vmatpush1.msra.mxu0 %v1562
    %1572 = vmatprep.subr.mxu0 0.0
    %1573 = vmatpush1.msra.mxu0 %v1563
    %1574 = vmatprep.subr.mxu0 0.0
    %1575 = vmatpush1.msra.mxu0 0.0
    %1576 = vmatprep.subr.mxu0 0.0
    %1577 = vmatpush1.msra.mxu0 0.0
    %1578 = vmatprep.subr.mxu0 0.0
    %1579 = vmatpush1.msra.mxu0 0.0
    %1580 = vmatprep.subr.mxu0 0.0
    %1581 = vmatpush1.msra.mxu0 0.0
    %1582 = vmatprep.subr.mxu0 0.0
    %1583 = vmatpush1.msra.mxu0 0.0
    %1584 = vmatprep.subr.mxu0 0.0
    %1585 = vmatpush1.msra.mxu0 0.0
    %1586 = vmatprep.subr.mxu0 0.0
    %1587 = vmatpush1.msra.mxu0 0.0
    %1588 = vmatprep.subr.mxu0 0.0
    %1589 = vmatpush1.msra.mxu0 0.0
    %1590 = vmatprep.subr.mxu0 0.0
    %1591 = vmatpush1.msra.mxu0 0.0
    %1592 = vmatprep.subr.mxu0 0.0
    %1593 = vmatpush1.msra.mxu0 0.0
    %1594 = vmatprep.subr.mxu0 0.0
    %1595 = vmatpush1.msra.mxu0 0.0
    %1596 = vmatprep.subr.mxu0 0.0
    %1597 = vmatpush1.msra.mxu0 0.0
    %1598 = vmatprep.subr.mxu0 0.0
    %1599 = vmatpush1.msra.mxu0 0.0
    %1600 = vmatprep.subr.mxu0 0.0
    %1601 = vmatpush1.msra.mxu0 0.0
    %1602 = vmatprep.subr.mxu0 0.0
    %1603 = vmatpush1.msra.mxu0 0.0
    %1604 = vmatprep.subr.mxu0 0.0
    %1605 = vmatpush1.msra.mxu0 0.0
    %1606 = vmatprep.subr.mxu0 0.0
    %1607 = vmatpush1.msra.mxu0 0.0
    %1608 = vmatprep.subr.mxu0 0.0
    %1609 = vmatpush1.msra.mxu0 0.0
    %1610 = vmatprep.subr.mxu0 0.0
    %1611 = vmatpush1.msra.mxu0 0.0
    %1612 = vmatprep.subr.mxu0 0.0
    %1613 = vmatpush1.msra.mxu0 0.0
    %1614 = vmatprep.subr.mxu0 0.0
    %1615 = vmatpush1.msra.mxu0 0.0
    %1616 = vmatprep.subr.mxu0 0.0
    %1617 = vmatpush1.msra.mxu0 0.0
    %1618 = vmatprep.subr.mxu0 0.0
    %1619 = vmatpush1.msra.mxu0 0.0
    %1620 = vmatprep.subr.mxu0 0.0
    %1621 = vmatpush1.msra.mxu0 0.0
    %1622 = vmatprep.subr.mxu0 0.0
    %1623 = vmatpush1.msra.mxu0 0.0
    %1624 = vmatprep.subr.mxu0 0.0
    %1625 = vmatpush1.msra.mxu0 0.0
    %1626 = vmatprep.subr.mxu0 0.0
    %1627 = vmatpush1.msra.mxu0 0.0
    %1628 = vmatprep.subr.mxu0 0.0
    %1629 = vmatpush1.msra.mxu0 0.0
    %1630 = vmatprep.mubr.f32.mxu0 0.0
    %1631 = vmatmul.mubr.f32.gmra.mrb[0].mxu0 %v1564
    %v1632 = vpop.f32.mrb[0].mxu0
    %v1633 = vadd.f32 0.0, %v1632
    %v1634 = vpop.f32.mrb[0].mxu0
    %1635 = vdwg.mxu0
    %v1636 = vadd.f32 %v1559, %v1633
    %v1637 = vxor.u32 %v1558, 2147483648
    %v1638 = vmul.f32 %v1637, 1.442695
    %v1639 = vpow.pop %v1638
    %v1640 = vadd.f32 %v1639, 1.0
    %v1641 = vrcp.pop %v1640
    %v1642 = vmul.f32 1.0, %v1641
    %v1643 = vtanh.pop %v1558
    %v1644 = vmul.f32 %v1642, %v1438
    %1646 = vrot.lane.b32.xlu0 %v1643, 64
    %v1647 = vpop.permute.xlu0 %1646
    %v1649 = vmul.f32 %v1642, %v1647
    %1651 = vrot.lane.b32.xlu0 %v1649, 32
    %v1652 = vpop.permute.xlu0 %1651
    %v1654 = vadd.f32 %v1644, %v1652
    %v1655 = vtanh.pop %v1654
    %1657 = vrot.lane.b32.xlu0 %v1655, 64
    %v1658 = vpop.permute.xlu0 %1657
    %v1660 = vmul.f32 %v1642, %v1658
    %v1661 = vxor.u32 %v1636, 2147483648
    %v1662 = vmul.f32 %v1661, 1.442695
    %v1663 = vpow.pop %v1662
    %v1664 = vadd.f32 %v1663, 1.0
    %v1665 = vrcp.pop %v1664
    %v1666 = vmul.f32 1.0, %v1665
    %v1667 = vtanh.pop %v1636
    %v1668 = vmul.f32 %v1666, %v1462
    %1670 = vrot.lane.b32.xlu0 %v1667, 64
    %v1671 = vpop.permute.xlu0 %1670
    %v1673 = vmul.f32 %v1666, %v1671
    %1675 = vrot.lane.b32.xlu0 %v1673, 32
    %v1676 = vpop.permute.xlu0 %1675
    %v1678 = vadd.f32 %v1668, %v1676
    %v1679 = vtanh.pop %v1678
    %1681 = vrot.lane.b32.xlu0 %v1679, 64
    %v1682 = vpop.permute.xlu0 %1681
    %v1684 = vmul.f32 %v1666, %v1682
    %1686 = vrot.lane.b32.xlu0 %v1660, 32
    %v1687 = vpop.permute.xlu0 %1686
    %s1689 = scalar_lea.vmem [#allocation4], 12
    %1690 = vst.msk [vmem:[%s1689] sm:$0x3] %vm393, %v1687
    %1692 = vrot.lane.b32.xlu0 %v1684, 32
    %v1693 = vpop.permute.xlu0 %1692
    %s1695 = scalar_lea.vmem [#allocation5], 2
    %1696 = vst.msk [vmem:[%s1695] sm:$0x3] %vm393, %v1693
    %v1697 = vld [vmem:[#allocation2 + $0xe] sm:$0x3]
    %v1698 = vld [vmem:[#allocation11] sm:$0xff]
    %v1699 = vld [vmem:[#allocation11 + $0x8] sm:$0xff]
    %v1700 = vld [vmem:[#allocation11 + $0x10] sm:$0xff]
    %v1701 = vld [vmem:[#allocation11 + $0x18] sm:$0xff]
    %v1702 = vsel %vm98, %v1687, 0
    %1704 = vmatprep.subr.mxu0 0.0
    %1705 = vmatpush1.msra.mxu0 %v1698
    %1706 = vmatprep.subr.mxu0 0.0
    %1707 = vmatpush1.msra.mxu0 %v1699
    %1708 = vmatprep.subr.mxu0 0.0
    %1709 = vmatpush1.msra.mxu0 %v1700
    %1710 = vmatprep.subr.mxu0 0.0
    %1711 = vmatpush1.msra.mxu0 %v1701
    %1712 = vmatprep.subr.mxu0 0.0
    %1713 = vmatpush1.msra.mxu0 0.0
    %1714 = vmatprep.subr.mxu0 0.0
    %1715 = vmatpush1.msra.mxu0 0.0
    %1716 = vmatprep.subr.mxu0 0.0
    %1717 = vmatpush1.msra.mxu0 0.0
    %1718 = vmatprep.subr.mxu0 0.0
    %1719 = vmatpush1.msra.mxu0 0.0
    %1720 = vmatprep.subr.mxu0 0.0
    %1721 = vmatpush1.msra.mxu0 0.0
    %1722 = vmatprep.subr.mxu0 0.0
    %1723 = vmatpush1.msra.mxu0 0.0
    %1724 = vmatprep.subr.mxu0 0.0
    %1725 = vmatpush1.msra.mxu0 0.0
    %1726 = vmatprep.subr.mxu0 0.0
    %1727 = vmatpush1.msra.mxu0 0.0
    %1728 = vmatprep.subr.mxu0 0.0
    %1729 = vmatpush1.msra.mxu0 0.0
    %1730 = vmatprep.subr.mxu0 0.0
    %1731 = vmatpush1.msra.mxu0 0.0
    %1732 = vmatprep.subr.mxu0 0.0
    %1733 = vmatpush1.msra.mxu0 0.0
    %1734 = vmatprep.subr.mxu0 0.0
    %1735 = vmatpush1.msra.mxu0 0.0
    %1736 = vmatprep.subr.mxu0 0.0
    %1737 = vmatpush1.msra.mxu0 0.0
    %1738 = vmatprep.subr.mxu0 0.0
    %1739 = vmatpush1.msra.mxu0 0.0
    %1740 = vmatprep.subr.mxu0 0.0
    %1741 = vmatpush1.msra.mxu0 0.0
    %1742 = vmatprep.subr.mxu0 0.0
    %1743 = vmatpush1.msra.mxu0 0.0
    %1744 = vmatprep.subr.mxu0 0.0
    %1745 = vmatpush1.msra.mxu0 0.0
    %1746 = vmatprep.subr.mxu0 0.0
    %1747 = vmatpush1.msra.mxu0 0.0
    %1748 = vmatprep.subr.mxu0 0.0
    %1749 = vmatpush1.msra.mxu0 0.0
    %1750 = vmatprep.subr.mxu0 0.0
    %1751 = vmatpush1.msra.mxu0 0.0
    %1752 = vmatprep.subr.mxu0 0.0
    %1753 = vmatpush1.msra.mxu0 0.0
    %1754 = vmatprep.subr.mxu0 0.0
    %1755 = vmatpush1.msra.mxu0 0.0
    %1756 = vmatprep.subr.mxu0 0.0
    %1757 = vmatpush1.msra.mxu0 0.0
    %1758 = vmatprep.subr.mxu0 0.0
    %1759 = vmatpush1.msra.mxu0 0.0
    %1760 = vmatprep.subr.mxu0 0.0
    %1761 = vmatpush1.msra.mxu0 0.0
    %1762 = vmatprep.subr.mxu0 0.0
    %1763 = vmatpush1.msra.mxu0 0.0
    %1764 = vmatprep.subr.mxu0 0.0
    %1765 = vmatpush1.msra.mxu0 0.0
    %1766 = vmatprep.subr.mxu0 0.0
    %1767 = vmatpush1.msra.mxu0 0.0
    %1768 = vmatprep.mubr.f32.mxu0 0.0
    %1769 = vmatmul.mubr.f32.gmra.mrb[0].mxu0 %v1702
    %v1770 = vpop.f32.mrb[0].mxu0
    %v1771 = vadd.f32 0.0, %v1770
    %v1772 = vpop.f32.mrb[0].mxu0
    %1773 = vdwg.mxu0
    %v1774 = vadd.f32 %v1697, %v1771
    %v1775 = vld [vmem:[#allocation3] sm:$0x3]
    %v1776 = vld [vmem:[#allocation12] sm:$0xff]
    %v1777 = vld [vmem:[#allocation12 + $0x8] sm:$0xff]
    %v1778 = vld [vmem:[#allocation12 + $0x10] sm:$0xff]
    %v1779 = vld [vmem:[#allocation12 + $0x18] sm:$0xff]
    %v1780 = vsel %vm98, %v1693, 0
    %1782 = vmatprep.subr.mxu0 0.0
    %1783 = vmatpush1.msra.mxu0 %v1776
    %1784 = vmatprep.subr.mxu0 0.0
    %1785 = vmatpush1.msra.mxu0 %v1777
    %1786 = vmatprep.subr.mxu0 0.0
    %1787 = vmatpush1.msra.mxu0 %v1778
    %1788 = vmatprep.subr.mxu0 0.0
    %1789 = vmatpush1.msra.mxu0 %v1779
    %1790 = vmatprep.subr.mxu0 0.0
    %1791 = vmatpush1.msra.mxu0 0.0
    %1792 = vmatprep.subr.mxu0 0.0
    %1793 = vmatpush1.msra.mxu0 0.0
    %1794 = vmatprep.subr.mxu0 0.0
    %1795 = vmatpush1.msra.mxu0 0.0
    %1796 = vmatprep.subr.mxu0 0.0
    %1797 = vmatpush1.msra.mxu0 0.0
    %1798 = vmatprep.subr.mxu0 0.0
    %1799 = vmatpush1.msra.mxu0 0.0
    %1800 = vmatprep.subr.mxu0 0.0
    %1801 = vmatpush1.msra.mxu0 0.0
    %1802 = vmatprep.subr.mxu0 0.0
    %1803 = vmatpush1.msra.mxu0 0.0
    %1804 = vmatprep.subr.mxu0 0.0
    %1805 = vmatpush1.msra.mxu0 0.0
    %1806 = vmatprep.subr.mxu0 0.0
    %1807 = vmatpush1.msra.mxu0 0.0
    %1808 = vmatprep.subr.mxu0 0.0
    %1809 = vmatpush1.msra.mxu0 0.0
    %1810 = vmatprep.subr.mxu0 0.0
    %1811 = vmatpush1.msra.mxu0 0.0
    %1812 = vmatprep.subr.mxu0 0.0
    %1813 = vmatpush1.msra.mxu0 0.0
    %1814 = vmatprep.subr.mxu0 0.0
    %1815 = vmatpush1.msra.mxu0 0.0
    %1816 = vmatprep.subr.mxu0 0.0
    %1817 = vmatpush1.msra.mxu0 0.0
    %1818 = vmatprep.subr.mxu0 0.0
    %1819 = vmatpush1.msra.mxu0 0.0
    %1820 = vmatprep.subr.mxu0 0.0
    %1821 = vmatpush1.msra.mxu0 0.0
    %1822 = vmatprep.subr.mxu0 0.0
    %1823 = vmatpush1.msra.mxu0 0.0
    %1824 = vmatprep.subr.mxu0 0.0
    %1825 = vmatpush1.msra.mxu0 0.0
    %1826 = vmatprep.subr.mxu0 0.0
    %1827 = vmatpush1.msra.mxu0 0.0
    %1828 = vmatprep.subr.mxu0 0.0
    %1829 = vmatpush1.msra.mxu0 0.0
    %1830 = vmatprep.subr.mxu0 0.0
    %1831 = vmatpush1.msra.mxu0 0.0
    %1832 = vmatprep.subr.mxu0 0.0
    %1833 = vmatpush1.msra.mxu0 0.0
    %1834 = vmatprep.subr.mxu0 0.0
    %1835 = vmatpush1.msra.mxu0 0.0
    %1836 = vmatprep.subr.mxu0 0.0
    %1837 = vmatpush1.msra.mxu0 0.0
    %1838 = vmatprep.subr.mxu0 0.0
    %1839 = vmatpush1.msra.mxu0 0.0
    %1840 = vmatprep.subr.mxu0 0.0
    %1841 = vmatpush1.msra.mxu0 0.0
    %1842 = vmatprep.subr.mxu0 0.0
    %1843 = vmatpush1.msra.mxu0 0.0
    %1844 = vmatprep.subr.mxu0 0.0
    %1845 = vmatpush1.msra.mxu0 0.0
    %1846 = vmatprep.mubr.f32.mxu0 0.0
    %1847 = vmatmul.mubr.f32.gmra.mrb[0].mxu0 %v1780
    %v1848 = vpop.f32.mrb[0].mxu0
    %v1849 = vadd.f32 0.0, %v1848
    %v1850 = vpop.f32.mrb[0].mxu0
    %1851 = vdwg.mxu0
    %v1852 = vadd.f32 %v1775, %v1849
    %v1853 = vxor.u32 %v1774, 2147483648
    %v1854 = vmul.f32 %v1853, 1.442695
    %v1855 = vpow.pop %v1854
    %v1856 = vadd.f32 %v1855, 1.0
    %v1857 = vrcp.pop %v1856
    %v1858 = vmul.f32 1.0, %v1857
    %v1859 = vtanh.pop %v1774
    %v1860 = vmul.f32 %v1858, %v1654
    %1862 = vrot.lane.b32.xlu0 %v1859, 64
    %v1863 = vpop.permute.xlu0 %1862
    %v1865 = vmul.f32 %v1858, %v1863
    %1867 = vrot.lane.b32.xlu0 %v1865, 32
    %v1868 = vpop.permute.xlu0 %1867
    %v1870 = vadd.f32 %v1860, %v1868
    %v1871 = vtanh.pop %v1870
    %1873 = vrot.lane.b32.xlu0 %v1871, 64
    %v1874 = vpop.permute.xlu0 %1873
    %v1876 = vmul.f32 %v1858, %v1874
    %v1877 = vxor.u32 %v1852, 2147483648
    %v1878 = vmul.f32 %v1877, 1.442695
    %v1879 = vpow.pop %v1878
    %v1880 = vadd.f32 %v1879, 1.0
    %v1881 = vrcp.pop %v1880
    %v1882 = vmul.f32 1.0, %v1881
    %v1883 = vtanh.pop %v1852
    %v1884 = vmul.f32 %v1882, %v1678
    %1886 = vrot.lane.b32.xlu0 %v1883, 64
    %v1887 = vpop.permute.xlu0 %1886
    %v1889 = vmul.f32 %v1882, %v1887
    %1891 = vrot.lane.b32.xlu0 %v1889, 32
    %v1892 = vpop.permute.xlu0 %1891
    %v1894 = vadd.f32 %v1884, %v1892
    %v1895 = vtanh.pop %v1894
    %1897 = vrot.lane.b32.xlu0 %v1895, 64
    %v1898 = vpop.permute.xlu0 %1897
    %v1900 = vmul.f32 %v1882, %v1898
    %1902 = vrot.lane.b32.xlu0 %v1876, 32
    %v1903 = vpop.permute.xlu0 %1902
    %s1905 = scalar_lea.vmem [#allocation4], 14
    %1906 = vst.msk [vmem:[%s1905] sm:$0x3] %vm393, %v1903
    %1908 = vrot.lane.b32.xlu0 %v1900, 32
    %v1909 = vpop.permute.xlu0 %1908
    %1911 = vst.msk [vmem:[#allocation5] sm:$0x3] %vm393, %v1909
    %v1912 = vld [vmem:[#allocation4] sm:$0x3]
    %v1913 = vld [vmem:[#allocation4 + $0x2] sm:$0x3]
    %v1914 = vld [vmem:[#allocation4 + $0x4] sm:$0x3]
    %v1915 = vld [vmem:[#allocation4 + $0x6] sm:$0x3]
    %v1916 = vld [vmem:[#allocation4 + $0x8] sm:$0x3]
    %v1917 = vld [vmem:[#allocation4 + $0xa] sm:$0x3]
    %v1918 = vld [vmem:[#allocation4 + $0xc] sm:$0x3]
    %v1919 = vld [vmem:[#allocation4 + $0xe] sm:$0x3]
    %1920 = vst.msk [vmem:[#allocation14] sm:$0x3] %vm393, %v1912
    %1921 = vst.msk [vmem:[#allocation14 + $0x2] sm:$0x3] %vm393, %v1913
    %1922 = vst.msk [vmem:[#allocation14 + $0x4] sm:$0x3] %vm393, %v1914
    %1923 = vst.msk [vmem:[#allocation14 + $0x6] sm:$0x3] %vm393, %v1915
    %1924 = vst.msk [vmem:[#allocation14 + $0x8] sm:$0x3] %vm393, %v1916
    %1925 = vst.msk [vmem:[#allocation14 + $0xa] sm:$0x3] %vm393, %v1917
    %1926 = vst.msk [vmem:[#allocation14 + $0xc] sm:$0x3] %vm393, %v1918
    %1927 = vst.msk [vmem:[#allocation14 + $0xe] sm:$0x3] %vm393, %v1919
    %v1928 = vld [vmem:[#allocation5] sm:$0x3]
    %v1929 = vld [vmem:[#allocation5 + $0x2] sm:$0x3]
    %v1930 = vld [vmem:[#allocation5 + $0x4] sm:$0x3]
    %v1931 = vld [vmem:[#allocation5 + $0x6] sm:$0x3]
    %v1932 = vld [vmem:[#allocation5 + $0x8] sm:$0x3]
    %v1933 = vld [vmem:[#allocation5 + $0xa] sm:$0x3]
    %v1934 = vld [vmem:[#allocation5 + $0xc] sm:$0x3]
    %v1935 = vld [vmem:[#allocation5 + $0xe] sm:$0x3]
    %1944 = vrot.lane.b32.xlu0 %v1928, 32
    %v1945 = vpop.permute.xlu0 %1944
    %1946 = vrot.lane.b32.xlu0 %v1929, 32
    %v1947 = vpop.permute.xlu0 %1946
    %1948 = vrot.lane.b32.xlu0 %v1930, 32
    %v1949 = vpop.permute.xlu0 %1948
    %1950 = vrot.lane.b32.xlu0 %v1931, 32
    %v1951 = vpop.permute.xlu0 %1950
    %1952 = vrot.lane.b32.xlu0 %v1932, 32
    %v1953 = vpop.permute.xlu0 %1952
    %1954 = vrot.lane.b32.xlu0 %v1933, 32
    %v1955 = vpop.permute.xlu0 %1954
    %1956 = vrot.lane.b32.xlu0 %v1934, 32
    %v1957 = vpop.permute.xlu0 %1956
    %1958 = vrot.lane.b32.xlu0 %v1935, 32
    %v1959 = vpop.permute.xlu0 %1958
    %vm1968 = vcmask 517376
    %1969 = vst.msk [vmem:[#allocation14] sm:$0x3] %vm1968, %v1945
    %1970 = vst.msk [vmem:[#allocation14 + $0x2] sm:$0x3] %vm1968, %v1947
    %1971 = vst.msk [vmem:[#allocation14 + $0x4] sm:$0x3] %vm1968, %v1949
    %1972 = vst.msk [vmem:[#allocation14 + $0x6] sm:$0x3] %vm1968, %v1951
    %1973 = vst.msk [vmem:[#allocation14 + $0x8] sm:$0x3] %vm1968, %v1953
    %1974 = vst.msk [vmem:[#allocation14 + $0xa] sm:$0x3] %vm1968, %v1955
    %1975 = vst.msk [vmem:[#allocation14 + $0xc] sm:$0x3] %vm1968, %v1957
    %1976 = vst.msk [vmem:[#allocation14 + $0xe] sm:$0x3] %vm1968, %v1959
    // Predicated region
    $region38: #{tpu_custom_call.1} parent=1 // pred_check
      _
    $region39: #{tpu_custom_call.1} parent=1 // pred_check_branch
      %1978 = sbr.rel (0) target = $region41
    $region40: #{tpu_custom_call.1} parent=1 // pred_region
      %s1980 = ssub.s32 256, 256
      %1981 = vsyncadd [#allocation8], %s1980
      %s1982 = sshll.u32 [#allocation14], 4
      %s1983 = int_to_ptr.vmem [resolvable:$true] %s1982
      %1988 = dma.vmem_to_hbm [thread:$0]  %s1983, 256, %s5, [#allocation8], 32, 32, 2
    $region41: #{tpu_custom_call.1} parent=1 // pred_fallthru
      _
    // Predicated region
    $region42: #{tpu_custom_call.1} parent=1 // pred_check
      _
    $region43: #{tpu_custom_call.1} parent=1 // pred_check_branch
      %1990 = sbr.rel (0) target = $region45
    $region44: #{tpu_custom_call.1} parent=1 // pred_region
      %1991 = dma.done [#allocation8], 256
    $region45: #{tpu_custom_call.1} parent=1 // pred_fallthru
      _
    %1992 = vsyncpa [#allocation7], 1
    %1993 = vsyncpa [#allocation10], 1
    %1994 = vsyncpa [#allocation13], 1
    %1995 = vsyncpa [#allocation8], 1

</llo_original>
